<compile_context>
chip_gen: v7x
topology: tpu7x:2x2x1
jax: 0.10.0
libtpu: 0.0.40
codegen_flags: <defaults>
</compile_context>

<pallas_src>
import functools
import jax
import jax.numpy as jnp
from jax import lax
from jax.experimental import pallas as pl
from jax.experimental.pallas import tpu as pltpu


_LN_EPS = 1e-5
_SQRT_2_OVER_PI = 0.7978845608028654

PARAM_KEYS = ("ln1_g", "ln1_b", "w_qkv", "w_out", "b_out",
              "ln2_g", "ln2_b", "w_ff1", "b_ff1", "w_ff2", "b_ff2")


def _layernorm(x, g, b):
    mu = jnp.mean(x, axis=-1, keepdims=True)
    xc = x - mu
    var = jnp.mean(xc * xc, axis=-1, keepdims=True)
    return xc * lax.rsqrt(var + _LN_EPS) * g + b


def _gelu_tanh(x):
    # TODO(synk): torch nn.GELU defaults to the exact erf form; tanh approx
    # used here and in the reference (max abs dev ~3e-4).
    return 0.5 * x * (1.0 + jnp.tanh(_SQRT_2_OVER_PI * (x + 0.044715 * x * x * x)))


# ------------------------- Fused Transformer kernel ------------------------ #
def _transformer_kernel(x_ref,
                        ln1_g_ref, ln1_b_ref, w_qkv_ref, w_out_ref, b_out_ref,
                        ln2_g_ref, ln2_b_ref, w_ff1_ref, b_ff1_ref, w_ff2_ref,
                        b_ff2_ref,
                        o_ref, h_scratch, *, heads):
    # Grid = (batch, layer).  One grid step == one layer of one batch element.
    l = pl.program_id(1)

    @pl.when(l == 0)
    def _():
        h_scratch[...] = x_ref[0].astype(jnp.float32)

    h = h_scratch[...]                                      # (N, D) f32 residual

    # ---------------- Residual(PreNorm(Attention)) ---------------- #
    xn = _layernorm(h, ln1_g_ref[0], ln1_b_ref[0])
    xn_b = xn.astype(jnp.bfloat16)

    proj = jnp.zeros_like(h)                                # (N, D) f32
    for hh in range(heads):
        # Per-head q/k/v via leading-axis weight blocks (no lane-offset slices
        # of activations).  Softmax scale is pre-folded into the q weights.
        q_h = jnp.dot(xn_b, w_qkv_ref[0, 0, hh],
                      preferred_element_type=jnp.float32)   # (N, Dh)
        k_h = jnp.dot(xn_b, w_qkv_ref[0, 1, hh],
                      preferred_element_type=jnp.float32)
        v_h = jnp.dot(xn_b, w_qkv_ref[0, 2, hh],
                      preferred_element_type=jnp.float32)
        # Contract last axes of both operands — no explicit k.T (no XLU pass).
        dots = lax.dot_general(q_h.astype(jnp.bfloat16), k_h.astype(jnp.bfloat16),
                               (((1,), (1,)), ((), ())),
                               preferred_element_type=jnp.float32)   # (N, N)
        dots = dots - jnp.max(dots, axis=-1, keepdims=True)
        p = jnp.exp(dots)
        attn = p * pl.reciprocal(jnp.sum(p, axis=-1, keepdims=True),
                                 approx=True)
        head_out = jnp.dot(attn.astype(jnp.bfloat16), v_h.astype(jnp.bfloat16),
                           preferred_element_type=jnp.float32)       # (N, Dh)
        # Fold the head merge into the out-projection (accumulate, no concat).
        proj = proj + jnp.dot(head_out.astype(jnp.bfloat16), w_out_ref[0, hh],
                              preferred_element_type=jnp.float32)    # (N, D)
    h = h + proj + b_out_ref[0]                             # residual

    # --------------- Residual(PreNorm(FeedForward)) --------------- #
    xn2 = _layernorm(h, ln2_g_ref[0], ln2_b_ref[0])
    h1 = jnp.dot(xn2.astype(jnp.bfloat16), w_ff1_ref[0],
                 preferred_element_type=jnp.float32) + b_ff1_ref[0]
    h1 = _gelu_tanh(h1)
    h2 = jnp.dot(h1.astype(jnp.bfloat16), w_ff2_ref[0],
                 preferred_element_type=jnp.float32) + b_ff2_ref[0]
    h = h + h2                                              # residual

    h_scratch[...] = h

    @pl.when(l == pl.num_programs(1) - 1)
    def _():
        o_ref[0] = h.astype(o_ref.dtype)


# --------------------------- Host-side param prep --------------------------- #
def prepare_kernel_params(params, *, heads, dim_head):
    """Permute / scale / bf16-cast weights into the kernel layout."""
    depth, D, _ = params["w_qkv"].shape
    scale = dim_head ** -0.5
    # (depth, D, 3*inner) -> (depth, 3, heads, D, dim_head)
    w_qkv = params["w_qkv"].reshape(depth, D, 3, heads, dim_head)
    w_qkv = w_qkv.transpose(0, 2, 3, 1, 4)
    w_qkv = w_qkv.at[:, 0].multiply(scale)       # bake softmax scale into q
    # (depth, inner, D) -> (depth, heads, dim_head, D)
    w_out = params["w_out"].reshape(depth, heads, dim_head, D)

    kp = dict(params)
    kp["w_qkv"] = w_qkv.astype(jnp.bfloat16)
    kp["w_out"] = w_out.astype(jnp.bfloat16)
    kp["w_ff1"] = params["w_ff1"].astype(jnp.bfloat16)
    kp["w_ff2"] = params["w_ff2"].astype(jnp.bfloat16)
    return kp


# ------------------------------ Module wrapper ------------------------------ #
def transformer_forward(x, params, *, heads, dim_head):
    """Reproduces vit_pytorch Transformer.forward with mask=None, dropout=0."""
    # TODO(synk): optional `mask` path (F.pad + masked_fill with -finfo.max)
    # not implemented; only mask=None is supported. Dropout(0) == identity.
    B, N, D = x.shape
    kp = prepare_kernel_params(params, heads=heads, dim_head=dim_head)
    depth = kp["w_qkv"].shape[0]

    def layer_spec(arr):
        n_rest = arr.ndim - 1

        def imap(b, l):
            return (l,) + (0,) * n_rest

        return pl.BlockSpec((1,) + arr.shape[1:], imap)

    in_specs = [pl.BlockSpec((1, N, D), lambda b, l: (b, 0, 0))]
    in_specs += [layer_spec(kp[k]) for k in PARAM_KEYS]

    kern = functools.partial(_transformer_kernel, heads=heads)

    return pl.pallas_call(
        kern,
        out_shape=jax.ShapeDtypeStruct((B, N, D), x.dtype),
        grid=(B, depth),
        in_specs=in_specs,
        out_specs=pl.BlockSpec((1, N, D), lambda b, l: (b, 0, 0)),
        scratch_shapes=[pltpu.VMEM((N, D), jnp.float32)],   # resident residual
        compiler_params=pltpu.CompilerParams(
            dimension_semantics=("parallel", "arbitrary"),
            vmem_limit_bytes=48 * 1024 * 1024),
    )(x, *[kp[k] for k in PARAM_KEYS])


# --------------------------------- Reference -------------------------------- #
def transformer_ref(x, params, *, depth, heads, dim_head):
    B, N, D = x.shape
    inner = heads * dim_head
    scale = dim_head ** -0.5
    h = x
    for l in range(depth):
        xn = _layernorm(h, params["ln1_g"][l], params["ln1_b"][l])
        qkv = xn @ params["w_qkv"][l]
        q, k, v = jnp.split(qkv, 3, axis=-1)
        sh = lambda t: t.reshape(B, N, heads, dim_head).transpose(0, 2, 1, 3)
        q, k, v = sh(q), sh(k), sh(v)
        dots = jnp.einsum("bhid,bhjd->bhij", q, k) * scale
        attn = jax.nn.softmax(dots, axis=-1)
        out = jnp.einsum("bhij,bhjd->bhid", attn, v)
        out = out.transpose(0, 2, 1, 3).reshape(B, N, inner)
        h = h + out @ params["w_out"][l] + params["b_out"][l]

        xn2 = _layernorm(h, params["ln2_g"][l], params["ln2_b"][l])
        ff = _gelu_tanh(xn2 @ params["w_ff1"][l] + params["b_ff1"][l])
        h = h + ff @ params["w_ff2"][l] + params["b_ff2"][l]
    return h


# ------------------------------------ Main ----------------------------------- #
if __name__ == "__main__":
    B, N, D = 2, 8, 32            # batch, seq, dim
    depth = 2
    heads, dim_head = 4, 16       # inner_dim = 64, project_out = True
    mlp_dim = 64
    inner = heads * dim_head

    key = jax.random.PRNGKey(0)
    ks = jax.random.split(key, 12)
    x = jax.random.normal(ks[0], (B, N, D), dtype=jnp.float32)
    params = {
        "ln1_g": 1.0 + 0.1 * jax.random.normal(ks[1], (depth, 1, D), dtype=jnp.float32),
        "ln1_b": 0.1 * jax.random.normal(ks[2], (depth, 1, D), dtype=jnp.float32),
        "w_qkv": 0.05 * jax.random.normal(ks[3], (depth, D, 3 * inner), dtype=jnp.float32),
        "w_out": 0.05 * jax.random.normal(ks[4], (depth, inner, D), dtype=jnp.float32),
        "b_out": 0.05 * jax.random.normal(ks[5], (depth, 1, D), dtype=jnp.float32),
        "ln2_g": 1.0 + 0.1 * jax.random.normal(ks[6], (depth, 1, D), dtype=jnp.float32),
        "ln2_b": 0.1 * jax.random.normal(ks[7], (depth, 1, D), dtype=jnp.float32),
        "w_ff1": 0.05 * jax.random.normal(ks[8], (depth, D, mlp_dim), dtype=jnp.float32),
        "b_ff1": 0.05 * jax.random.normal(ks[9], (depth, 1, mlp_dim), dtype=jnp.float32),
        "w_ff2": 0.05 * jax.random.normal(ks[10], (depth, mlp_dim, D), dtype=jnp.float32),
        "b_ff2": 0.05 * jax.random.normal(ks[11], (depth, 1, D), dtype=jnp.float32),
    }

    out = transformer_forward(x, params, heads=heads, dim_head=dim_head)
    out = jax.block_until_ready(out)

    # Reference in fp32, using the same bf16-rounded matmul weights the kernel
    # stores (isolates the activation-cast / approx-reciprocal error).
    rbf16 = lambda w: w.astype(jnp.bfloat16).astype(jnp.float32)
    params_ref = dict(params)
    for kname in ("w_qkv", "w_out", "w_ff1", "w_ff2"):
        params_ref[kname] = rbf16(params[kname])
    ref = transformer_ref(x, params_ref, depth=depth, heads=heads, dim_head=dim_head)

    assert out.shape == (B, N, D)
    max_err = float(jnp.max(jnp.abs(out - ref)))
    # Tolerance covers bf16 matmul operands + pl.reciprocal(approx=True).
    assert jnp.allclose(out, ref, atol=3e-2, rtol=3e-2), \
        f"mismatch vs reference (max |err|={max_err})"

    print("KERNEL_OK")
</pallas_src>

<mosaic_0001>
module attributes {stable_mosaic.version = 11 : i64} {
  func.func @_transformer_kernel(%arg0: i32, %arg1: i32, %arg2: memref<1x8x32xf32, #tpu.memory_space<vmem>>, %arg3: memref<1x1x32xf32, #tpu.memory_space<vmem>>, %arg4: memref<1x1x32xf32, #tpu.memory_space<vmem>>, %arg5: memref<1x3x4x32x16xbf16, #tpu.memory_space<vmem>>, %arg6: memref<1x4x16x32xbf16, #tpu.memory_space<vmem>>, %arg7: memref<1x1x32xf32, #tpu.memory_space<vmem>>, %arg8: memref<1x1x32xf32, #tpu.memory_space<vmem>>, %arg9: memref<1x1x32xf32, #tpu.memory_space<vmem>>, %arg10: memref<1x32x64xbf16, #tpu.memory_space<vmem>>, %arg11: memref<1x1x64xf32, #tpu.memory_space<vmem>>, %arg12: memref<1x64x32xbf16, #tpu.memory_space<vmem>>, %arg13: memref<1x1x32xf32, #tpu.memory_space<vmem>>, %arg14: memref<1x8x32xf32, #tpu.memory_space<vmem>>, %arg15: memref<8x32xf32, #tpu.memory_space<vmem>>) attributes {dimension_semantics = [#tpu.dimension_semantics<parallel>, #tpu.dimension_semantics<arbitrary>], iteration_bounds = array<i64: 2, 2>, scalar_prefetch = 0 : i64, scratch_operands = 1 : i64, tpu.core_type = #tpu.core_type<tc>, window_params = [{transform_indices = @transform_0, window_bounds = array<i64: 1, 8, 32>}, {transform_indices = @transform_1, window_bounds = array<i64: 1, 1, 32>}, {transform_indices = @transform_2, window_bounds = array<i64: 1, 1, 32>}, {transform_indices = @transform_3, window_bounds = array<i64: 1, 3, 4, 32, 16>}, {transform_indices = @transform_4, window_bounds = array<i64: 1, 4, 16, 32>}, {transform_indices = @transform_5, window_bounds = array<i64: 1, 1, 32>}, {transform_indices = @transform_6, window_bounds = array<i64: 1, 1, 32>}, {transform_indices = @transform_7, window_bounds = array<i64: 1, 1, 32>}, {transform_indices = @transform_8, window_bounds = array<i64: 1, 32, 64>}, {transform_indices = @transform_9, window_bounds = array<i64: 1, 1, 64>}, {transform_indices = @transform_10, window_bounds = array<i64: 1, 64, 32>}, {transform_indices = @transform_11, window_bounds = array<i64: 1, 1, 32>}, {transform_indices = @transform_12, window_bounds = array<i64: 1, 8, 32>}]} {
    %c0_i32 = arith.constant 0 : i32
    %0 = arith.cmpi eq, %arg1, %c0_i32 : i32
    %1 = arith.extui %0 : i1 to i32
    %c0_i32_0 = arith.constant 0 : i32
    %2 = arith.cmpi ne, %1, %c0_i32_0 : i32
    scf.if %2 {
      %c0_153 = arith.constant 0 : index
      %c0_154 = arith.constant 0 : index
      %c0_155 = arith.constant 0 : index
      %213 = vector.load %arg2[%c0_153, %c0_154, %c0_155] : memref<1x8x32xf32, #tpu.memory_space<vmem>>, vector<1x8x32xf32>
      %214 = vector.shape_cast %213 : vector<1x8x32xf32> to vector<8x32xf32>
      %c0_156 = arith.constant 0 : index
      %c0_157 = arith.constant 0 : index
      %215 = vector.load %arg15[%c0_156, %c0_157] : memref<8x32xf32, #tpu.memory_space<vmem>>, vector<8x32xf32>
      tpu.vector_store %arg15[%c0_156, %c0_157], %214 {strides = array<i32>} : memref<8x32xf32, #tpu.memory_space<vmem>>, vector<8x32xf32>,
    } else {
    }
    %c0 = arith.constant 0 : index
    %c0_1 = arith.constant 0 : index
    %3 = vector.load %arg15[%c0, %c0_1] : memref<8x32xf32, #tpu.memory_space<vmem>>, vector<8x32xf32>
    %c0_2 = arith.constant 0 : index
    %c0_3 = arith.constant 0 : index
    %c0_4 = arith.constant 0 : index
    %4 = vector.load %arg3[%c0_2, %c0_3, %c0_4] : memref<1x1x32xf32, #tpu.memory_space<vmem>>, vector<1x1x32xf32>
    %5 = vector.shape_cast %4 : vector<1x1x32xf32> to vector<1x32xf32>
    %c0_5 = arith.constant 0 : index
    %c0_6 = arith.constant 0 : index
    %c0_7 = arith.constant 0 : index
    %6 = vector.load %arg4[%c0_5, %c0_6, %c0_7] : memref<1x1x32xf32, #tpu.memory_space<vmem>>, vector<1x1x32xf32>
    %7 = vector.shape_cast %6 : vector<1x1x32xf32> to vector<1x32xf32>
    %cst = arith.constant dense<0.000000e+00> : vector<8xf32>
    %8 = vector.multi_reduction <add>, %3, %cst [1] : vector<8x32xf32> to vector<8xf32>
    %9 = vector.shape_cast %8 : vector<8xf32> to vector<8x1xf32>
    %cst_8 = arith.constant 3.200000e+01 : f32
    %10 = vector.broadcast %cst_8 : f32 to vector<8x1xf32>
    %11 = arith.divf %9, %10 : vector<8x1xf32>
    %12 = vector.broadcast %11 : vector<8x1xf32> to vector<8x32xf32>
    %13 = arith.subf %3, %12 : vector<8x32xf32>
    %14 = arith.mulf %13, %13 : vector<8x32xf32>
    %cst_9 = arith.constant dense<0.000000e+00> : vector<8xf32>
    %15 = vector.multi_reduction <add>, %14, %cst_9 [1] : vector<8x32xf32> to vector<8xf32>
    %16 = vector.shape_cast %15 : vector<8xf32> to vector<8x1xf32>
    %cst_10 = arith.constant 3.200000e+01 : f32
    %17 = vector.broadcast %cst_10 : f32 to vector<8x1xf32>
    %18 = arith.divf %16, %17 : vector<8x1xf32>
    %cst_11 = arith.constant 9.99999974E-6 : f32
    %19 = vector.broadcast %cst_11 : f32 to vector<8x1xf32>
    %20 = arith.addf %18, %19 : vector<8x1xf32>
    %21 = math.rsqrt %20 : vector<8x1xf32>
    %22 = vector.broadcast %21 : vector<8x1xf32> to vector<8x32xf32>
    %23 = arith.mulf %13, %22 : vector<8x32xf32>
    %24 = vector.broadcast %5 : vector<1x32xf32> to vector<8x32xf32>
    %25 = arith.mulf %23, %24 : vector<8x32xf32>
    %26 = vector.broadcast %7 : vector<1x32xf32> to vector<8x32xf32>
    %27 = arith.addf %25, %26 : vector<8x32xf32>
    %28 = arith.truncf %27 : vector<8x32xf32> to vector<8x32xbf16>
    %cst_12 = arith.constant 0.000000e+00 : f32
    %29 = vector.broadcast %cst_12 : f32 to vector<8x32xf32>
    %c0_13 = arith.constant 0 : index
    %c0_14 = arith.constant 0 : index
    %c0_15 = arith.constant 0 : index
    %c0_16 = arith.constant 0 : index
    %c0_17 = arith.constant 0 : index
    %30 = vector.load %arg5[%c0_13, %c0_14, %c0_15, %c0_16, %c0_17] : memref<1x3x4x32x16xbf16, #tpu.memory_space<vmem>>, vector<1x1x1x32x16xbf16>
    %31 = vector.shape_cast %30 : vector<1x1x1x32x16xbf16> to vector<32x16xbf16>
    %cst_18 = arith.constant dense<0.000000e+00> : vector<8x16xf32>
    %32 = tpu.matmul %28, %31, %cst_18 {dimension_numbers = #tpu.dot_dimension_numbers<[1], [0], [0], [1], [0, 0, 1, 1], [], []>} : vector<8x32xbf16>, vector<32x16xbf16>, vector<8x16xf32> -> vector<8x16xf32>
    %c0_19 = arith.constant 0 : index
    %c1 = arith.constant 1 : index
    %c0_20 = arith.constant 0 : index
    %c0_21 = arith.constant 0 : index
    %c0_22 = arith.constant 0 : index
    %33 = vector.load %arg5[%c0_19, %c1, %c0_20, %c0_21, %c0_22] : memref<1x3x4x32x16xbf16, #tpu.memory_space<vmem>>, vector<1x1x1x32x16xbf16>
    %34 = vector.shape_cast %33 : vector<1x1x1x32x16xbf16> to vector<32x16xbf16>
    %cst_23 = arith.constant dense<0.000000e+00> : vector<8x16xf32>
    %35 = tpu.matmul %28, %34, %cst_23 {dimension_numbers = #tpu.dot_dimension_numbers<[1], [0], [0], [1], [0, 0, 1, 1], [], []>} : vector<8x32xbf16>, vector<32x16xbf16>, vector<8x16xf32> -> vector<8x16xf32>
    %c0_24 = arith.constant 0 : index
    %c2 = arith.constant 2 : index
    %c0_25 = arith.constant 0 : index
    %c0_26 = arith.constant 0 : index
    %c0_27 = arith.constant 0 : index
    %36 = vector.load %arg5[%c0_24, %c2, %c0_25, %c0_26, %c0_27] : memref<1x3x4x32x16xbf16, #tpu.memory_space<vmem>>, vector<1x1x1x32x16xbf16>
    %37 = vector.shape_cast %36 : vector<1x1x1x32x16xbf16> to vector<32x16xbf16>
    %cst_28 = arith.constant dense<0.000000e+00> : vector<8x16xf32>
    %38 = tpu.matmul %28, %37, %cst_28 {dimension_numbers = #tpu.dot_dimension_numbers<[1], [0], [0], [1], [0, 0, 1, 1], [], []>} : vector<8x32xbf16>, vector<32x16xbf16>, vector<8x16xf32> -> vector<8x16xf32>
    %39 = arith.truncf %32 : vector<8x16xf32> to vector<8x16xbf16>
    %40 = arith.truncf %35 : vector<8x16xf32> to vector<8x16xbf16>
    %cst_29 = arith.constant dense<0.000000e+00> : vector<8x8xf32>
    %41 = tpu.matmul %39, %40, %cst_29 {dimension_numbers = #tpu.dot_dimension_numbers<[1], [1], [0], [0], [0, 0, 1, 0], [], []>} : vector<8x16xbf16>, vector<8x16xbf16>, vector<8x8xf32> -> vector<8x8xf32>
    %cst_30 = arith.constant dense<0xFF800000> : vector<8xf32>
    %42 = vector.multi_reduction <maximumf>, %41, %cst_30 [1] : vector<8x8xf32> to vector<8xf32>
    %43 = vector.shape_cast %42 : vector<8xf32> to vector<8x1xf32>
    %44 = vector.broadcast %43 : vector<8x1xf32> to vector<8x8xf32>
    %45 = arith.subf %41, %44 : vector<8x8xf32>
    %46 = math.exp %45 : vector<8x8xf32>
    %cst_31 = arith.constant dense<0.000000e+00> : vector<8xf32>
    %47 = vector.multi_reduction <add>, %46, %cst_31 [1] : vector<8x8xf32> to vector<8xf32>
    %48 = vector.shape_cast %47 : vector<8xf32> to vector<8x1xf32>
    %49 = tpu.reciprocal %48 {approx = true} : vector<8x1xf32> -> vector<8x1xf32>
    %50 = vector.broadcast %49 : vector<8x1xf32> to vector<8x8xf32>
    %51 = arith.mulf %46, %50 : vector<8x8xf32>
    %52 = arith.truncf %51 : vector<8x8xf32> to vector<8x8xbf16>
    %53 = arith.truncf %38 : vector<8x16xf32> to vector<8x16xbf16>
    %cst_32 = arith.constant dense<0.000000e+00> : vector<8x16xf32>
    %54 = tpu.matmul %52, %53, %cst_32 {dimension_numbers = #tpu.dot_dimension_numbers<[1], [0], [0], [1], [0, 0, 1, 1], [], []>} : vector<8x8xbf16>, vector<8x16xbf16>, vector<8x16xf32> -> vector<8x16xf32>
    %55 = arith.truncf %54 : vector<8x16xf32> to vector<8x16xbf16>
    %c0_33 = arith.constant 0 : index
    %c0_34 = arith.constant 0 : index
    %c0_35 = arith.constant 0 : index
    %c0_36 = arith.constant 0 : index
    %56 = vector.load %arg6[%c0_33, %c0_34, %c0_35, %c0_36] : memref<1x4x16x32xbf16, #tpu.memory_space<vmem>>, vector<1x1x16x32xbf16>
    %57 = vector.shape_cast %56 : vector<1x1x16x32xbf16> to vector<16x32xbf16>
    %cst_37 = arith.constant dense<0.000000e+00> : vector<8x32xf32>
    %58 = tpu.matmul %55, %57, %cst_37 {dimension_numbers = #tpu.dot_dimension_numbers<[1], [0], [0], [1], [0, 0, 1, 1], [], []>} : vector<8x16xbf16>, vector<16x32xbf16>, vector<8x32xf32> -> vector<8x32xf32>
    %59 = arith.addf %29, %58 : vector<8x32xf32>
    %c0_38 = arith.constant 0 : index
    %c0_39 = arith.constant 0 : index
    %c1_40 = arith.constant 1 : index
    %c0_41 = arith.constant 0 : index
    %c0_42 = arith.constant 0 : index
    %60 = vector.load %arg5[%c0_38, %c0_39, %c1_40, %c0_41, %c0_42] : memref<1x3x4x32x16xbf16, #tpu.memory_space<vmem>>, vector<1x1x1x32x16xbf16>
    %61 = vector.shape_cast %60 : vector<1x1x1x32x16xbf16> to vector<32x16xbf16>
    %cst_43 = arith.constant dense<0.000000e+00> : vector<8x16xf32>
    %62 = tpu.matmul %28, %61, %cst_43 {dimension_numbers = #tpu.dot_dimension_numbers<[1], [0], [0], [1], [0, 0, 1, 1], [], []>} : vector<8x32xbf16>, vector<32x16xbf16>, vector<8x16xf32> -> vector<8x16xf32>
    %c0_44 = arith.constant 0 : index
    %c1_45 = arith.constant 1 : index
    %c1_46 = arith.constant 1 : index
    %c0_47 = arith.constant 0 : index
    %c0_48 = arith.constant 0 : index
    %63 = vector.load %arg5[%c0_44, %c1_45, %c1_46, %c0_47, %c0_48] : memref<1x3x4x32x16xbf16, #tpu.memory_space<vmem>>, vector<1x1x1x32x16xbf16>
    %64 = vector.shape_cast %63 : vector<1x1x1x32x16xbf16> to vector<32x16xbf16>
    %cst_49 = arith.constant dense<0.000000e+00> : vector<8x16xf32>
    %65 = tpu.matmul %28, %64, %cst_49 {dimension_numbers = #tpu.dot_dimension_numbers<[1], [0], [0], [1], [0, 0, 1, 1], [], []>} : vector<8x32xbf16>, vector<32x16xbf16>, vector<8x16xf32> -> vector<8x16xf32>
    %c0_50 = arith.constant 0 : index
    %c2_51 = arith.constant 2 : index
    %c1_52 = arith.constant 1 : index
    %c0_53 = arith.constant 0 : index
    %c0_54 = arith.constant 0 : index
    %66 = vector.load %arg5[%c0_50, %c2_51, %c1_52, %c0_53, %c0_54] : memref<1x3x4x32x16xbf16, #tpu.memory_space<vmem>>, vector<1x1x1x32x16xbf16>
    %67 = vector.shape_cast %66 : vector<1x1x1x32x16xbf16> to vector<32x16xbf16>
    %cst_55 = arith.constant dense<0.000000e+00> : vector<8x16xf32>
    %68 = tpu.matmul %28, %67, %cst_55 {dimension_numbers = #tpu.dot_dimension_numbers<[1], [0], [0], [1], [0, 0, 1, 1], [], []>} : vector<8x32xbf16>, vector<32x16xbf16>, vector<8x16xf32> -> vector<8x16xf32>
    %69 = arith.truncf %62 : vector<8x16xf32> to vector<8x16xbf16>
    %70 = arith.truncf %65 : vector<8x16xf32> to vector<8x16xbf16>
    %cst_56 = arith.constant dense<0.000000e+00> : vector<8x8xf32>
    %71 = tpu.matmul %69, %70, %cst_56 {dimension_numbers = #tpu.dot_dimension_numbers<[1], [1], [0], [0], [0, 0, 1, 0], [], []>} : vector<8x16xbf16>, vector<8x16xbf16>, vector<8x8xf32> -> vector<8x8xf32>
    %cst_57 = arith.constant dense<0xFF800000> : vector<8xf32>
    %72 = vector.multi_reduction <maximumf>, %71, %cst_57 [1] : vector<8x8xf32> to vector<8xf32>
    %73 = vector.shape_cast %72 : vector<8xf32> to vector<8x1xf32>
    %74 = vector.broadcast %73 : vector<8x1xf32> to vector<8x8xf32>
    %75 = arith.subf %71, %74 : vector<8x8xf32>
    %76 = math.exp %75 : vector<8x8xf32>
    %cst_58 = arith.constant dense<0.000000e+00> : vector<8xf32>
    %77 = vector.multi_reduction <add>, %76, %cst_58 [1] : vector<8x8xf32> to vector<8xf32>
    %78 = vector.shape_cast %77 : vector<8xf32> to vector<8x1xf32>
    %79 = tpu.reciprocal %78 {approx = true} : vector<8x1xf32> -> vector<8x1xf32>
    %80 = vector.broadcast %79 : vector<8x1xf32> to vector<8x8xf32>
    %81 = arith.mulf %76, %80 : vector<8x8xf32>
    %82 = arith.truncf %81 : vector<8x8xf32> to vector<8x8xbf16>
    %83 = arith.truncf %68 : vector<8x16xf32> to vector<8x16xbf16>
    %cst_59 = arith.constant dense<0.000000e+00> : vector<8x16xf32>
    %84 = tpu.matmul %82, %83, %cst_59 {dimension_numbers = #tpu.dot_dimension_numbers<[1], [0], [0], [1], [0, 0, 1, 1], [], []>} : vector<8x8xbf16>, vector<8x16xbf16>, vector<8x16xf32> -> vector<8x16xf32>
    %85 = arith.truncf %84 : vector<8x16xf32> to vector<8x16xbf16>
    %c0_60 = arith.constant 0 : index
    %c1_61 = arith.constant 1 : index
    %c0_62 = arith.constant 0 : index
    %c0_63 = arith.constant 0 : index
    %86 = vector.load %arg6[%c0_60, %c1_61, %c0_62, %c0_63] : memref<1x4x16x32xbf16, #tpu.memory_space<vmem>>, vector<1x1x16x32xbf16>
    %87 = vector.shape_cast %86 : vector<1x1x16x32xbf16> to vector<16x32xbf16>
    %cst_64 = arith.constant dense<0.000000e+00> : vector<8x32xf32>
    %88 = tpu.matmul %85, %87, %cst_64 {dimension_numbers = #tpu.dot_dimension_numbers<[1], [0], [0], [1], [0, 0, 1, 1], [], []>} : vector<8x16xbf16>, vector<16x32xbf16>, vector<8x32xf32> -> vector<8x32xf32>
    %89 = arith.addf %59, %88 : vector<8x32xf32>
    %c0_65 = arith.constant 0 : index
    %c0_66 = arith.constant 0 : index
    %c2_67 = arith.constant 2 : index
    %c0_68 = arith.constant 0 : index
    %c0_69 = arith.constant 0 : index
    %90 = vector.load %arg5[%c0_65, %c0_66, %c2_67, %c0_68, %c0_69] : memref<1x3x4x32x16xbf16, #tpu.memory_space<vmem>>, vector<1x1x1x32x16xbf16>
    %91 = vector.shape_cast %90 : vector<1x1x1x32x16xbf16> to vector<32x16xbf16>
    %cst_70 = arith.constant dense<0.000000e+00> : vector<8x16xf32>
    %92 = tpu.matmul %28, %91, %cst_70 {dimension_numbers = #tpu.dot_dimension_numbers<[1], [0], [0], [1], [0, 0, 1, 1], [], []>} : vector<8x32xbf16>, vector<32x16xbf16>, vector<8x16xf32> -> vector<8x16xf32>
    %c0_71 = arith.constant 0 : index
    %c1_72 = arith.constant 1 : index
    %c2_73 = arith.constant 2 : index
    %c0_74 = arith.constant 0 : index
    %c0_75 = arith.constant 0 : index
    %93 = vector.load %arg5[%c0_71, %c1_72, %c2_73, %c0_74, %c0_75] : memref<1x3x4x32x16xbf16, #tpu.memory_space<vmem>>, vector<1x1x1x32x16xbf16>
    %94 = vector.shape_cast %93 : vector<1x1x1x32x16xbf16> to vector<32x16xbf16>
    %cst_76 = arith.constant dense<0.000000e+00> : vector<8x16xf32>
    %95 = tpu.matmul %28, %94, %cst_76 {dimension_numbers = #tpu.dot_dimension_numbers<[1], [0], [0], [1], [0, 0, 1, 1], [], []>} : vector<8x32xbf16>, vector<32x16xbf16>, vector<8x16xf32> -> vector<8x16xf32>
    %c0_77 = arith.constant 0 : index
    %c2_78 = arith.constant 2 : index
    %c2_79 = arith.constant 2 : index
    %c0_80 = arith.constant 0 : index
    %c0_81 = arith.constant 0 : index
    %96 = vector.load %arg5[%c0_77, %c2_78, %c2_79, %c0_80, %c0_81] : memref<1x3x4x32x16xbf16, #tpu.memory_space<vmem>>, vector<1x1x1x32x16xbf16>
    %97 = vector.shape_cast %96 : vector<1x1x1x32x16xbf16> to vector<32x16xbf16>
    %cst_82 = arith.constant dense<0.000000e+00> : vector<8x16xf32>
    %98 = tpu.matmul %28, %97, %cst_82 {dimension_numbers = #tpu.dot_dimension_numbers<[1], [0], [0], [1], [0, 0, 1, 1], [], []>} : vector<8x32xbf16>, vector<32x16xbf16>, vector<8x16xf32> -> vector<8x16xf32>
    %99 = arith.truncf %92 : vector<8x16xf32> to vector<8x16xbf16>
    %100 = arith.truncf %95 : vector<8x16xf32> to vector<8x16xbf16>
    %cst_83 = arith.constant dense<0.000000e+00> : vector<8x8xf32>
    %101 = tpu.matmul %99, %100, %cst_83 {dimension_numbers = #tpu.dot_dimension_numbers<[1], [1], [0], [0], [0, 0, 1, 0], [], []>} : vector<8x16xbf16>, vector<8x16xbf16>, vector<8x8xf32> -> vector<8x8xf32>
    %cst_84 = arith.constant dense<0xFF800000> : vector<8xf32>
    %102 = vector.multi_reduction <maximumf>, %101, %cst_84 [1] : vector<8x8xf32> to vector<8xf32>
    %103 = vector.shape_cast %102 : vector<8xf32> to vector<8x1xf32>
    %104 = vector.broadcast %103 : vector<8x1xf32> to vector<8x8xf32>
    %105 = arith.subf %101, %104 : vector<8x8xf32>
    %106 = math.exp %105 : vector<8x8xf32>
    %cst_85 = arith.constant dense<0.000000e+00> : vector<8xf32>
    %107 = vector.multi_reduction <add>, %106, %cst_85 [1] : vector<8x8xf32> to vector<8xf32>
    %108 = vector.shape_cast %107 : vector<8xf32> to vector<8x1xf32>
    %109 = tpu.reciprocal %108 {approx = true} : vector<8x1xf32> -> vector<8x1xf32>
    %110 = vector.broadcast %109 : vector<8x1xf32> to vector<8x8xf32>
    %111 = arith.mulf %106, %110 : vector<8x8xf32>
    %112 = arith.truncf %111 : vector<8x8xf32> to vector<8x8xbf16>
    %113 = arith.truncf %98 : vector<8x16xf32> to vector<8x16xbf16>
    %cst_86 = arith.constant dense<0.000000e+00> : vector<8x16xf32>
    %114 = tpu.matmul %112, %113, %cst_86 {dimension_numbers = #tpu.dot_dimension_numbers<[1], [0], [0], [1], [0, 0, 1, 1], [], []>} : vector<8x8xbf16>, vector<8x16xbf16>, vector<8x16xf32> -> vector<8x16xf32>
    %115 = arith.truncf %114 : vector<8x16xf32> to vector<8x16xbf16>
    %c0_87 = arith.constant 0 : index
    %c2_88 = arith.constant 2 : index
    %c0_89 = arith.constant 0 : index
    %c0_90 = arith.constant 0 : index
    %116 = vector.load %arg6[%c0_87, %c2_88, %c0_89, %c0_90] : memref<1x4x16x32xbf16, #tpu.memory_space<vmem>>, vector<1x1x16x32xbf16>
    %117 = vector.shape_cast %116 : vector<1x1x16x32xbf16> to vector<16x32xbf16>
    %cst_91 = arith.constant dense<0.000000e+00> : vector<8x32xf32>
    %118 = tpu.matmul %115, %117, %cst_91 {dimension_numbers = #tpu.dot_dimension_numbers<[1], [0], [0], [1], [0, 0, 1, 1], [], []>} : vector<8x16xbf16>, vector<16x32xbf16>, vector<8x32xf32> -> vector<8x32xf32>
    %119 = arith.addf %89, %118 : vector<8x32xf32>
    %c0_92 = arith.constant 0 : index
    %c0_93 = arith.constant 0 : index
    %c3 = arith.constant 3 : index
    %c0_94 = arith.constant 0 : index
    %c0_95 = arith.constant 0 : index
    %120 = vector.load %arg5[%c0_92, %c0_93, %c3, %c0_94, %c0_95] : memref<1x3x4x32x16xbf16, #tpu.memory_space<vmem>>, vector<1x1x1x32x16xbf16>
    %121 = vector.shape_cast %120 : vector<1x1x1x32x16xbf16> to vector<32x16xbf16>
    %cst_96 = arith.constant dense<0.000000e+00> : vector<8x16xf32>
    %122 = tpu.matmul %28, %121, %cst_96 {dimension_numbers = #tpu.dot_dimension_numbers<[1], [0], [0], [1], [0, 0, 1, 1], [], []>} : vector<8x32xbf16>, vector<32x16xbf16>, vector<8x16xf32> -> vector<8x16xf32>
    %c0_97 = arith.constant 0 : index
    %c1_98 = arith.constant 1 : index
    %c3_99 = arith.constant 3 : index
    %c0_100 = arith.constant 0 : index
    %c0_101 = arith.constant 0 : index
    %123 = vector.load %arg5[%c0_97, %c1_98, %c3_99, %c0_100, %c0_101] : memref<1x3x4x32x16xbf16, #tpu.memory_space<vmem>>, vector<1x1x1x32x16xbf16>
    %124 = vector.shape_cast %123 : vector<1x1x1x32x16xbf16> to vector<32x16xbf16>
    %cst_102 = arith.constant dense<0.000000e+00> : vector<8x16xf32>
    %125 = tpu.matmul %28, %124, %cst_102 {dimension_numbers = #tpu.dot_dimension_numbers<[1], [0], [0], [1], [0, 0, 1, 1], [], []>} : vector<8x32xbf16>, vector<32x16xbf16>, vector<8x16xf32> -> vector<8x16xf32>
    %c0_103 = arith.constant 0 : index
    %c2_104 = arith.constant 2 : index
    %c3_105 = arith.constant 3 : index
    %c0_106 = arith.constant 0 : index
    %c0_107 = arith.constant 0 : index
    %126 = vector.load %arg5[%c0_103, %c2_104, %c3_105, %c0_106, %c0_107] : memref<1x3x4x32x16xbf16, #tpu.memory_space<vmem>>, vector<1x1x1x32x16xbf16>
    %127 = vector.shape_cast %126 : vector<1x1x1x32x16xbf16> to vector<32x16xbf16>
    %cst_108 = arith.constant dense<0.000000e+00> : vector<8x16xf32>
    %128 = tpu.matmul %28, %127, %cst_108 {dimension_numbers = #tpu.dot_dimension_numbers<[1], [0], [0], [1], [0, 0, 1, 1], [], []>} : vector<8x32xbf16>, vector<32x16xbf16>, vector<8x16xf32> -> vector<8x16xf32>
    %129 = arith.truncf %122 : vector<8x16xf32> to vector<8x16xbf16>
    %130 = arith.truncf %125 : vector<8x16xf32> to vector<8x16xbf16>
    %cst_109 = arith.constant dense<0.000000e+00> : vector<8x8xf32>
    %131 = tpu.matmul %129, %130, %cst_109 {dimension_numbers = #tpu.dot_dimension_numbers<[1], [1], [0], [0], [0, 0, 1, 0], [], []>} : vector<8x16xbf16>, vector<8x16xbf16>, vector<8x8xf32> -> vector<8x8xf32>
    %cst_110 = arith.constant dense<0xFF800000> : vector<8xf32>
    %132 = vector.multi_reduction <maximumf>, %131, %cst_110 [1] : vector<8x8xf32> to vector<8xf32>
    %133 = vector.shape_cast %132 : vector<8xf32> to vector<8x1xf32>
    %134 = vector.broadcast %133 : vector<8x1xf32> to vector<8x8xf32>
    %135 = arith.subf %131, %134 : vector<8x8xf32>
    %136 = math.exp %135 : vector<8x8xf32>
    %cst_111 = arith.constant dense<0.000000e+00> : vector<8xf32>
    %137 = vector.multi_reduction <add>, %136, %cst_111 [1] : vector<8x8xf32> to vector<8xf32>
    %138 = vector.shape_cast %137 : vector<8xf32> to vector<8x1xf32>
    %139 = tpu.reciprocal %138 {approx = true} : vector<8x1xf32> -> vector<8x1xf32>
    %140 = vector.broadcast %139 : vector<8x1xf32> to vector<8x8xf32>
    %141 = arith.mulf %136, %140 : vector<8x8xf32>
    %142 = arith.truncf %141 : vector<8x8xf32> to vector<8x8xbf16>
    %143 = arith.truncf %128 : vector<8x16xf32> to vector<8x16xbf16>
    %cst_112 = arith.constant dense<0.000000e+00> : vector<8x16xf32>
    %144 = tpu.matmul %142, %143, %cst_112 {dimension_numbers = #tpu.dot_dimension_numbers<[1], [0], [0], [1], [0, 0, 1, 1], [], []>} : vector<8x8xbf16>, vector<8x16xbf16>, vector<8x16xf32> -> vector<8x16xf32>
    %145 = arith.truncf %144 : vector<8x16xf32> to vector<8x16xbf16>
    %c0_113 = arith.constant 0 : index
    %c3_114 = arith.constant 3 : index
    %c0_115 = arith.constant 0 : index
    %c0_116 = arith.constant 0 : index
    %146 = vector.load %arg6[%c0_113, %c3_114, %c0_115, %c0_116] : memref<1x4x16x32xbf16, #tpu.memory_space<vmem>>, vector<1x1x16x32xbf16>
    %147 = vector.shape_cast %146 : vector<1x1x16x32xbf16> to vector<16x32xbf16>
    %cst_117 = arith.constant dense<0.000000e+00> : vector<8x32xf32>
    %148 = tpu.matmul %145, %147, %cst_117 {dimension_numbers = #tpu.dot_dimension_numbers<[1], [0], [0], [1], [0, 0, 1, 1], [], []>} : vector<8x16xbf16>, vector<16x32xbf16>, vector<8x32xf32> -> vector<8x32xf32>
    %149 = arith.addf %119, %148 : vector<8x32xf32>
    %150 = arith.addf %3, %149 : vector<8x32xf32>
    %c0_118 = arith.constant 0 : index
    %c0_119 = arith.constant 0 : index
    %c0_120 = arith.constant 0 : index
    %151 = vector.load %arg7[%c0_118, %c0_119, %c0_120] : memref<1x1x32xf32, #tpu.memory_space<vmem>>, vector<1x1x32xf32>
    %152 = vector.shape_cast %151 : vector<1x1x32xf32> to vector<1x32xf32>
    %153 = vector.broadcast %152 : vector<1x32xf32> to vector<8x32xf32>
    %154 = arith.addf %150, %153 : vector<8x32xf32>
    %c0_121 = arith.constant 0 : index
    %c0_122 = arith.constant 0 : index
    %c0_123 = arith.constant 0 : index
    %155 = vector.load %arg8[%c0_121, %c0_122, %c0_123] : memref<1x1x32xf32, #tpu.memory_space<vmem>>, vector<1x1x32xf32>
    %156 = vector.shape_cast %155 : vector<1x1x32xf32> to vector<1x32xf32>
    %c0_124 = arith.constant 0 : index
    %c0_125 = arith.constant 0 : index
    %c0_126 = arith.constant 0 : index
    %157 = vector.load %arg9[%c0_124, %c0_125, %c0_126] : memref<1x1x32xf32, #tpu.memory_space<vmem>>, vector<1x1x32xf32>
    %158 = vector.shape_cast %157 : vector<1x1x32xf32> to vector<1x32xf32>
    %cst_127 = arith.constant dense<0.000000e+00> : vector<8xf32>
    %159 = vector.multi_reduction <add>, %154, %cst_127 [1] : vector<8x32xf32> to vector<8xf32>
    %160 = vector.shape_cast %159 : vector<8xf32> to vector<8x1xf32>
    %cst_128 = arith.constant 3.200000e+01 : f32
    %161 = vector.broadcast %cst_128 : f32 to vector<8x1xf32>
    %162 = arith.divf %160, %161 : vector<8x1xf32>
    %163 = vector.broadcast %162 : vector<8x1xf32> to vector<8x32xf32>
    %164 = arith.subf %154, %163 : vector<8x32xf32>
    %165 = arith.mulf %164, %164 : vector<8x32xf32>
    %cst_129 = arith.constant dense<0.000000e+00> : vector<8xf32>
    %166 = vector.multi_reduction <add>, %165, %cst_129 [1] : vector<8x32xf32> to vector<8xf32>
    %167 = vector.shape_cast %166 : vector<8xf32> to vector<8x1xf32>
    %cst_130 = arith.constant 3.200000e+01 : f32
    %168 = vector.broadcast %cst_130 : f32 to vector<8x1xf32>
    %169 = arith.divf %167, %168 : vector<8x1xf32>
    %cst_131 = arith.constant 9.99999974E-6 : f32
    %170 = vector.broadcast %cst_131 : f32 to vector<8x1xf32>
    %171 = arith.addf %169, %170 : vector<8x1xf32>
    %172 = math.rsqrt %171 : vector<8x1xf32>
    %173 = vector.broadcast %172 : vector<8x1xf32> to vector<8x32xf32>
    %174 = arith.mulf %164, %173 : vector<8x32xf32>
    %175 = vector.broadcast %156 : vector<1x32xf32> to vector<8x32xf32>
    %176 = arith.mulf %174, %175 : vector<8x32xf32>
    %177 = vector.broadcast %158 : vector<1x32xf32> to vector<8x32xf32>
    %178 = arith.addf %176, %177 : vector<8x32xf32>
    %179 = arith.truncf %178 : vector<8x32xf32> to vector<8x32xbf16>
    %c0_132 = arith.constant 0 : index
    %c0_133 = arith.constant 0 : index
    %c0_134 = arith.constant 0 : index
    %180 = vector.load %arg10[%c0_132, %c0_133, %c0_134] : memref<1x32x64xbf16, #tpu.memory_space<vmem>>, vector<1x32x64xbf16>
    %181 = vector.shape_cast %180 : vector<1x32x64xbf16> to vector<32x64xbf16>
    %cst_135 = arith.constant dense<0.000000e+00> : vector<8x64xf32>
    %182 = tpu.matmul %179, %181, %cst_135 {dimension_numbers = #tpu.dot_dimension_numbers<[1], [0], [0], [1], [0, 0, 1, 1], [], []>} : vector<8x32xbf16>, vector<32x64xbf16>, vector<8x64xf32> -> vector<8x64xf32>
    %c0_136 = arith.constant 0 : index
    %c0_137 = arith.constant 0 : index
    %c0_138 = arith.constant 0 : index
    %183 = vector.load %arg11[%c0_136, %c0_137, %c0_138] : memref<1x1x64xf32, #tpu.memory_space<vmem>>, vector<1x1x64xf32>
    %184 = vector.shape_cast %183 : vector<1x1x64xf32> to vector<1x64xf32>
    %185 = vector.broadcast %184 : vector<1x64xf32> to vector<8x64xf32>
    %186 = arith.addf %182, %185 : vector<8x64xf32>
    %cst_139 = arith.constant 5.000000e-01 : f32
    %187 = vector.broadcast %cst_139 : f32 to vector<8x64xf32>
    %188 = arith.mulf %187, %186 : vector<8x64xf32>
    %cst_140 = arith.constant 4.471500e-02 : f32
    %189 = vector.broadcast %cst_140 : f32 to vector<8x64xf32>
    %190 = arith.mulf %189, %186 : vector<8x64xf32>
    %191 = arith.mulf %190, %186 : vector<8x64xf32>
    %192 = arith.mulf %191, %186 : vector<8x64xf32>
    %193 = arith.addf %186, %192 : vector<8x64xf32>
    %cst_141 = arith.constant 0.797884583 : f32
    %194 = vector.broadcast %cst_141 : f32 to vector<8x64xf32>
    %195 = arith.mulf %194, %193 : vector<8x64xf32>
    %196 = math.tanh %195 : vector<8x64xf32>
    %cst_142 = arith.constant 1.000000e+00 : f32
    %197 = vector.broadcast %cst_142 : f32 to vector<8x64xf32>
    %198 = arith.addf %197, %196 : vector<8x64xf32>
    %199 = arith.mulf %188, %198 : vector<8x64xf32>
    %200 = arith.truncf %199 : vector<8x64xf32> to vector<8x64xbf16>
    %c0_143 = arith.constant 0 : index
    %c0_144 = arith.constant 0 : index
    %c0_145 = arith.constant 0 : index
    %201 = vector.load %arg12[%c0_143, %c0_144, %c0_145] : memref<1x64x32xbf16, #tpu.memory_space<vmem>>, vector<1x64x32xbf16>
    %202 = vector.shape_cast %201 : vector<1x64x32xbf16> to vector<64x32xbf16>
    %cst_146 = arith.constant dense<0.000000e+00> : vector<8x32xf32>
    %203 = tpu.matmul %200, %202, %cst_146 {dimension_numbers = #tpu.dot_dimension_numbers<[1], [0], [0], [1], [0, 0, 1, 1], [], []>} : vector<8x64xbf16>, vector<64x32xbf16>, vector<8x32xf32> -> vector<8x32xf32>
    %c0_147 = arith.constant 0 : index
    %c0_148 = arith.constant 0 : index
    %c0_149 = arith.constant 0 : index
    %204 = vector.load %arg13[%c0_147, %c0_148, %c0_149] : memref<1x1x32xf32, #tpu.memory_space<vmem>>, vector<1x1x32xf32>
    %205 = vector.shape_cast %204 : vector<1x1x32xf32> to vector<1x32xf32>
    %206 = vector.broadcast %205 : vector<1x32xf32> to vector<8x32xf32>
    %207 = arith.addf %203, %206 : vector<8x32xf32>
    %208 = arith.addf %154, %207 : vector<8x32xf32>
    %c0_150 = arith.constant 0 : index
    %c0_151 = arith.constant 0 : index
    %209 = vector.load %arg15[%c0_150, %c0_151] : memref<8x32xf32, #tpu.memory_space<vmem>>, vector<8x32xf32>
    tpu.vector_store %arg15[%c0_150, %c0_151], %208 {strides = array<i32>} : memref<8x32xf32, #tpu.memory_space<vmem>>, vector<8x32xf32>,
    %c1_i32 = arith.constant 1 : i32
    %210 = arith.cmpi eq, %arg1, %c1_i32 : i32
    %211 = arith.extui %210 : i1 to i32
    %c0_i32_152 = arith.constant 0 : i32
    %212 = arith.cmpi ne, %211, %c0_i32_152 : i32
    scf.if %212 {
      %c0_153 = arith.constant 0 : index
      %c0_154 = arith.constant 0 : index
      %c0_155 = arith.constant 0 : index
      %213 = vector.load %arg14[%c0_153, %c0_154, %c0_155] : memref<1x8x32xf32, #tpu.memory_space<vmem>>, vector<1x8x32xf32>
      %214 = vector.shape_cast %213 : vector<1x8x32xf32> to vector<8x32xf32>
      %215 = vector.shape_cast %208 : vector<8x32xf32> to vector<1x8x32xf32>
      tpu.vector_store %arg14[%c0_153, %c0_154, %c0_155], %215 {strides = array<i32>} : memref<1x8x32xf32, #tpu.memory_space<vmem>>, vector<1x8x32xf32>,
    } else {
    }
    return
  }
  func.func @transform_0(%arg0: i32, %arg1: i32) -> (i32, i32, i32) {
    %c0_i32 = arith.constant 0 : i32
    %c0_i32_0 = arith.constant 0 : i32
    %c0_i32_1 = arith.constant 0 : i32
    return %arg0, %c0_i32, %c0_i32_0 : i32, i32, i32
  }
  func.func @transform_1(%arg0: i32, %arg1: i32) -> (i32, i32, i32) {
    %c0_i32 = arith.constant 0 : i32
    %c0_i32_0 = arith.constant 0 : i32
    %c0_i32_1 = arith.constant 0 : i32
    return %arg1, %c0_i32, %c0_i32_0 : i32, i32, i32
  }
  func.func @transform_2(%arg0: i32, %arg1: i32) -> (i32, i32, i32) {
    %c0_i32 = arith.constant 0 : i32
    %c0_i32_0 = arith.constant 0 : i32
    %c0_i32_1 = arith.constant 0 : i32
    return %arg1, %c0_i32, %c0_i32_0 : i32, i32, i32
  }
  func.func @transform_3(%arg0: i32, %arg1: i32) -> (i32, i32, i32, i32, i32) {
    %c0_i32 = arith.constant 0 : i32
    %c0_i32_0 = arith.constant 0 : i32
    %c0_i32_1 = arith.constant 0 : i32
    %c0_i32_2 = arith.constant 0 : i32
    %c0_i32_3 = arith.constant 0 : i32
    return %arg1, %c0_i32, %c0_i32_0, %c0_i32_1, %c0_i32_2 : i32, i32, i32, i32, i32
  }
  func.func @transform_4(%arg0: i32, %arg1: i32) -> (i32, i32, i32, i32) {
    %c0_i32 = arith.constant 0 : i32
    %c0_i32_0 = arith.constant 0 : i32
    %c0_i32_1 = arith.constant 0 : i32
    %c0_i32_2 = arith.constant 0 : i32
    return %arg1, %c0_i32, %c0_i32_0, %c0_i32_1 : i32, i32, i32, i32
  }
  func.func @transform_5(%arg0: i32, %arg1: i32) -> (i32, i32, i32) {
    %c0_i32 = arith.constant 0 : i32
    %c0_i32_0 = arith.constant 0 : i32
    %c0_i32_1 = arith.constant 0 : i32
    return %arg1, %c0_i32, %c0_i32_0 : i32, i32, i32
  }
  func.func @transform_6(%arg0: i32, %arg1: i32) -> (i32, i32, i32) {
    %c0_i32 = arith.constant 0 : i32
    %c0_i32_0 = arith.constant 0 : i32
    %c0_i32_1 = arith.constant 0 : i32
    return %arg1, %c0_i32, %c0_i32_0 : i32, i32, i32
  }
  func.func @transform_7(%arg0: i32, %arg1: i32) -> (i32, i32, i32) {
    %c0_i32 = arith.constant 0 : i32
    %c0_i32_0 = arith.constant 0 : i32
    %c0_i32_1 = arith.constant 0 : i32
    return %arg1, %c0_i32, %c0_i32_0 : i32, i32, i32
  }
  func.func @transform_8(%arg0: i32, %arg1: i32) -> (i32, i32, i32) {
    %c0_i32 = arith.constant 0 : i32
    %c0_i32_0 = arith.constant 0 : i32
    %c0_i32_1 = arith.constant 0 : i32
    return %arg1, %c0_i32, %c0_i32_0 : i32, i32, i32
  }
  func.func @transform_9(%arg0: i32, %arg1: i32) -> (i32, i32, i32) {
    %c0_i32 = arith.constant 0 : i32
    %c0_i32_0 = arith.constant 0 : i32
    %c0_i32_1 = arith.constant 0 : i32
    return %arg1, %c0_i32, %c0_i32_0 : i32, i32, i32
  }
  func.func @transform_10(%arg0: i32, %arg1: i32) -> (i32, i32, i32) {
    %c0_i32 = arith.constant 0 : i32
    %c0_i32_0 = arith.constant 0 : i32
    %c0_i32_1 = arith.constant 0 : i32
    return %arg1, %c0_i32, %c0_i32_0 : i32, i32, i32
  }
  func.func @transform_11(%arg0: i32, %arg1: i32) -> (i32, i32, i32) {
    %c0_i32 = arith.constant 0 : i32
    %c0_i32_0 = arith.constant 0 : i32
    %c0_i32_1 = arith.constant 0 : i32
    return %arg1, %c0_i32, %c0_i32_0 : i32, i32, i32
  }
  func.func @transform_12(%arg0: i32, %arg1: i32) -> (i32, i32, i32) {
    %c0_i32 = arith.constant 0 : i32
    %c0_i32_0 = arith.constant 0 : i32
    %c0_i32_1 = arith.constant 0 : i32
    return %arg0, %c0_i32, %c0_i32_0 : i32, i32, i32
  }
}

</mosaic_0001>

<llo_original>
// kernel: tpu_custom_call.1
$region0: #{tpu_custom_call.1}
  #allocation0 [shape = 'u32[]', space=smem, size = 0x4, offset = 0x4, fixed_abs, tag = 'smem constant byte address 0x4 - core index']
  #allocation1 [shape = 'u32[144,128]{1,0:T(1,128)}', space=vmem, size = 0x12000, scoped, tag = 'internal scratch']
  #allocation2 [shape = 'f32[8,32]{1,0:T(8,128)}', space=vmem, size = 0x1000, scoped, tag = 'scratch operand']
  %s0 = inlined_call_operand.vmem [shape: f32[2,8,32], index: 0, kind: input, shape index: {}]
  %s1 = inlined_call_operand.vmem [shape: f32[2,1,32], index: 1, kind: input, shape index: {}]
  %s2 = inlined_call_operand.vmem [shape: f32[2,1,32], index: 2, kind: input, shape index: {}]
  %s3 = inlined_call_operand.vmem [shape: bf16[2,3,4,32,16], index: 3, kind: input, shape index: {}]
  %s4 = inlined_call_operand.vmem [shape: bf16[2,4,16,32], index: 4, kind: input, shape index: {}]
  %s5 = inlined_call_operand.vmem [shape: f32[2,1,32], index: 5, kind: input, shape index: {}]
  %s6 = inlined_call_operand.vmem [shape: f32[2,1,32], index: 6, kind: input, shape index: {}]
  %s7 = inlined_call_operand.vmem [shape: f32[2,1,32], index: 7, kind: input, shape index: {}]
  %s8 = inlined_call_operand.vmem [shape: bf16[2,32,64], index: 8, kind: input, shape index: {}]
  %s9 = inlined_call_operand.vmem [shape: f32[2,1,64], index: 9, kind: input, shape index: {}]
  %s10 = inlined_call_operand.vmem [shape: bf16[2,64,32], index: 10, kind: input, shape index: {}]
  %s11 = inlined_call_operand.vmem [shape: f32[2,1,32], index: 11, kind: input, shape index: {}]
  %s12 = inlined_call_operand.hbm [shape: f32[2,8,32], index: 12, kind: output, shape index: {}]
  %s13 = sld [smem:[#allocation0]]
  $region89: #{tpu_custom_call.1} parent=0
    _
  %s15 = ssub.s32 1, %s13
  %s16 = scalar_select 0, %s15, %s13
  $region1: #{tpu_custom_call.1} parent=0
    #allocation3 [shape = 'u8[8192]{0}', space=vmem, size = 0x2000, scoped, tag = 'output window, operand 0']
    #allocation4 [shape = 's32[2]{0}', space=sflag, size = 0x8, scoped, tag = 'scoped memory for tpu_custom_call.1']
    %17 = vsyncpa [#allocation4], 0
    %s18 = scalar_lea.sflag [#allocation4], 1
    %19 = vsyncpa %s18, 0
    loop: start=0, step=1, limit=6
    $region2: #{tpu_custom_call.1} parent=1 // loop_pre_header
      _
    $region3: #{tpu_custom_call.1} parent=1 // loop_header
      %s21 = sphi 0, %s25
      %p22 = scmp.ge.s32.totalorder %s21, 6
      %s28 = sphi 0, %s40
      %s29 = sphi 0, %s36
      %s30 = sphi 0, %s28
      %s31 = sphi 0, %s29
      %s32 = sphi 0, %s30
      %s33 = sphi 0, %s31
      %s43 = sphi 0, %s45
      %s46 = sphi 0, %s43
      %s47 = sphi 0, %s46
      %s63 = sphi 0, %s47
      %s69 = sphi 0, %s71
      %s72 = sphi 0, %s69
      %s73 = sphi 0, %s72
      %s89 = sphi 0, %s73
      %s95 = sphi 0, %s97
      %s98 = sphi 0, %s95
      %s99 = sphi 0, %s98
      %s115 = sphi 0, %s99
      %s121 = sphi 0, %s123
      %s124 = sphi 0, %s121
      %s125 = sphi 0, %s124
      %s141 = sphi 0, %s125
      %s147 = sphi 0, %s149
      %s150 = sphi 0, %s147
      %s151 = sphi 0, %s150
      %s167 = sphi 0, %s151
      %s173 = sphi 0, %s175
      %s176 = sphi 0, %s173
      %s177 = sphi 0, %s176
      %s193 = sphi 0, %s177
      %s199 = sphi 0, %s201
      %s202 = sphi 0, %s199
      %s203 = sphi 0, %s202
      %s219 = sphi 0, %s203
      %s225 = sphi 0, %s227
      %s228 = sphi 0, %s225
      %s229 = sphi 0, %s228
      %s245 = sphi 0, %s229
      %s251 = sphi 0, %s253
      %s254 = sphi 0, %s251
      %s255 = sphi 0, %s254
      %s271 = sphi 0, %s255
      %s277 = sphi 0, %s279
      %s280 = sphi 0, %s277
      %s281 = sphi 0, %s280
      %s297 = sphi 0, %s281
      %s303 = sphi 0, %s305
      %s306 = sphi 0, %s303
      %s307 = sphi 0, %s306
      %s323 = sphi 0, %s307
      %s329 = sphi 0, %s331
      %s332 = sphi 0, %s329
      %s333 = sphi 0, %s332
      %s349 = sphi 0, %s333
      %s355 = sphi 0, %s357
      %s358 = sphi 0, %s355
      %s359 = sphi 0, %s358
      %s375 = sphi 0, %s359
    $region4: #{tpu_custom_call.1} parent=1 // loop_header_branch
      %24 = sbr.rel (%p22) target = $region8
    $region5: #{tpu_custom_call.1} parent=1 // loop_body
      %s26 = ssub.s32 %s21, 1
      %s27 = ssub.s32 %s21, 2
      %s34 = sadd.s32 1, %s29
      %p35 = scmp.ge.s32.totalorder %s34, 2
      %s36 = scalar_select %p35, 0, %s34
      %s37 = sadd.s32 1, %s28
      %s38 = scalar_select %p35, %s37, %s28
      %p39 = scmp.ge.s32.totalorder %s38, 2
      %s40 = scalar_select %p39, 0, %s38
      %s41 = ssub.s32 %s28, %s40
      %p42 = scmp.eq.s32.totalorder %s41, 0
      %s44 = sadd.s32 %s43, 1
      %s45 = scalar_select %p42, %s43, %s44
      %p48 = pneg %p42
      %p49 = scmp.eq.s32.totalorder %s21, 3
      %p50 = por %p48, %p49
      %p51 = scmp.ne.s32.totalorder %s43, %s46
      %p52 = scmp.eq.s32.totalorder %s21, 0
      %p53 = por %p51, %p52
      %p54 = scmp.ne.s32.totalorder %s43, %s46
      %p55 = scmp.eq.s32.totalorder %s26, 3
      %p56 = por %p54, %p55
      %p57 = scmp.ne.s32.totalorder %s46, %s47
      %p58 = scmp.eq.s32.totalorder %s26, 0
      %p59 = por %p57, %p58
      %p60 = scmp.ne.s32.totalorder %s46, %s47
      %p61 = scmp.eq.s32.totalorder %s27, 3
      %p62 = por %p60, %p61
      %p64 = scmp.ne.s32.totalorder %s47, %s63
      %p65 = scmp.eq.s32.totalorder %s27, 0
      %p66 = por %p64, %p65
      %s67 = ssub.s32 %s29, %s36
      %p68 = scmp.eq.s32.totalorder %s67, 0
      %s70 = sadd.s32 %s69, 1
      %s71 = scalar_select %p68, %s69, %s70
      %p74 = pneg %p68
      %p75 = scmp.eq.s32.totalorder %s21, 3
      %p76 = por %p74, %p75
      %p77 = scmp.ne.s32.totalorder %s69, %s72
      %p78 = scmp.eq.s32.totalorder %s21, 0
      %p79 = por %p77, %p78
      %p80 = scmp.ne.s32.totalorder %s69, %s72
      %p81 = scmp.eq.s32.totalorder %s26, 3
      %p82 = por %p80, %p81
      %p83 = scmp.ne.s32.totalorder %s72, %s73
      %p84 = scmp.eq.s32.totalorder %s26, 0
      %p85 = por %p83, %p84
      %p86 = scmp.ne.s32.totalorder %s72, %s73
      %p87 = scmp.eq.s32.totalorder %s27, 3
      %p88 = por %p86, %p87
      %p90 = scmp.ne.s32.totalorder %s73, %s89
      %p91 = scmp.eq.s32.totalorder %s27, 0
      %p92 = por %p90, %p91
      %s93 = ssub.s32 %s29, %s36
      %p94 = scmp.eq.s32.totalorder %s93, 0
      %s96 = sadd.s32 %s95, 1
      %s97 = scalar_select %p94, %s95, %s96
      %p100 = pneg %p94
      %p101 = scmp.eq.s32.totalorder %s21, 3
      %p102 = por %p100, %p101
      %p103 = scmp.ne.s32.totalorder %s95, %s98
      %p104 = scmp.eq.s32.totalorder %s21, 0
      %p105 = por %p103, %p104
      %p106 = scmp.ne.s32.totalorder %s95, %s98
      %p107 = scmp.eq.s32.totalorder %s26, 3
      %p108 = por %p106, %p107
      %p109 = scmp.ne.s32.totalorder %s98, %s99
      %p110 = scmp.eq.s32.totalorder %s26, 0
      %p111 = por %p109, %p110
      %p112 = scmp.ne.s32.totalorder %s98, %s99
      %p113 = scmp.eq.s32.totalorder %s27, 3
      %p114 = por %p112, %p113
      %p116 = scmp.ne.s32.totalorder %s99, %s115
      %p117 = scmp.eq.s32.totalorder %s27, 0
      %p118 = por %p116, %p117
      %s119 = ssub.s32 %s29, %s36
      %p120 = scmp.eq.s32.totalorder %s119, 0
      %s122 = sadd.s32 %s121, 1
      %s123 = scalar_select %p120, %s121, %s122
      %p126 = pneg %p120
      %p127 = scmp.eq.s32.totalorder %s21, 3
      %p128 = por %p126, %p127
      %p129 = scmp.ne.s32.totalorder %s121, %s124
      %p130 = scmp.eq.s32.totalorder %s21, 0
      %p131 = por %p129, %p130
      %p132 = scmp.ne.s32.totalorder %s121, %s124
      %p133 = scmp.eq.s32.totalorder %s26, 3
      %p134 = por %p132, %p133
      %p135 = scmp.ne.s32.totalorder %s124, %s125
      %p136 = scmp.eq.s32.totalorder %s26, 0
      %p137 = por %p135, %p136
      %p138 = scmp.ne.s32.totalorder %s124, %s125
      %p139 = scmp.eq.s32.totalorder %s27, 3
      %p140 = por %p138, %p139
      %p142 = scmp.ne.s32.totalorder %s125, %s141
      %p143 = scmp.eq.s32.totalorder %s27, 0
      %p144 = por %p142, %p143
      %s145 = ssub.s32 %s29, %s36
      %p146 = scmp.eq.s32.totalorder %s145, 0
      %s148 = sadd.s32 %s147, 1
      %s149 = scalar_select %p146, %s147, %s148
      %p152 = pneg %p146
      %p153 = scmp.eq.s32.totalorder %s21, 3
      %p154 = por %p152, %p153
      %p155 = scmp.ne.s32.totalorder %s147, %s150
      %p156 = scmp.eq.s32.totalorder %s21, 0
      %p157 = por %p155, %p156
      %p158 = scmp.ne.s32.totalorder %s147, %s150
      %p159 = scmp.eq.s32.totalorder %s26, 3
      %p160 = por %p158, %p159
      %p161 = scmp.ne.s32.totalorder %s150, %s151
      %p162 = scmp.eq.s32.totalorder %s26, 0
      %p163 = por %p161, %p162
      %p164 = scmp.ne.s32.totalorder %s150, %s151
      %p165 = scmp.eq.s32.totalorder %s27, 3
      %p166 = por %p164, %p165
      %p168 = scmp.ne.s32.totalorder %s151, %s167
      %p169 = scmp.eq.s32.totalorder %s27, 0
      %p170 = por %p168, %p169
      %s171 = ssub.s32 %s29, %s36
      %p172 = scmp.eq.s32.totalorder %s171, 0
      %s174 = sadd.s32 %s173, 1
      %s175 = scalar_select %p172, %s173, %s174
      %p178 = pneg %p172
      %p179 = scmp.eq.s32.totalorder %s21, 3
      %p180 = por %p178, %p179
      %p181 = scmp.ne.s32.totalorder %s173, %s176
      %p182 = scmp.eq.s32.totalorder %s21, 0
      %p183 = por %p181, %p182
      %p184 = scmp.ne.s32.totalorder %s173, %s176
      %p185 = scmp.eq.s32.totalorder %s26, 3
      %p186 = por %p184, %p185
      %p187 = scmp.ne.s32.totalorder %s176, %s177
      %p188 = scmp.eq.s32.totalorder %s26, 0
      %p189 = por %p187, %p188
      %p190 = scmp.ne.s32.totalorder %s176, %s177
      %p191 = scmp.eq.s32.totalorder %s27, 3
      %p192 = por %p190, %p191
      %p194 = scmp.ne.s32.totalorder %s177, %s193
      %p195 = scmp.eq.s32.totalorder %s27, 0
      %p196 = por %p194, %p195
      %s197 = ssub.s32 %s29, %s36
      %p198 = scmp.eq.s32.totalorder %s197, 0
      %s200 = sadd.s32 %s199, 1
      %s201 = scalar_select %p198, %s199, %s200
      %p204 = pneg %p198
      %p205 = scmp.eq.s32.totalorder %s21, 3
      %p206 = por %p204, %p205
      %p207 = scmp.ne.s32.totalorder %s199, %s202
      %p208 = scmp.eq.s32.totalorder %s21, 0
      %p209 = por %p207, %p208
      %p210 = scmp.ne.s32.totalorder %s199, %s202
      %p211 = scmp.eq.s32.totalorder %s26, 3
      %p212 = por %p210, %p211
      %p213 = scmp.ne.s32.totalorder %s202, %s203
      %p214 = scmp.eq.s32.totalorder %s26, 0
      %p215 = por %p213, %p214
      %p216 = scmp.ne.s32.totalorder %s202, %s203
      %p217 = scmp.eq.s32.totalorder %s27, 3
      %p218 = por %p216, %p217
      %p220 = scmp.ne.s32.totalorder %s203, %s219
      %p221 = scmp.eq.s32.totalorder %s27, 0
      %p222 = por %p220, %p221
      %s223 = ssub.s32 %s29, %s36
      %p224 = scmp.eq.s32.totalorder %s223, 0
      %s226 = sadd.s32 %s225, 1
      %s227 = scalar_select %p224, %s225, %s226
      %p230 = pneg %p224
      %p231 = scmp.eq.s32.totalorder %s21, 3
      %p232 = por %p230, %p231
      %p233 = scmp.ne.s32.totalorder %s225, %s228
      %p234 = scmp.eq.s32.totalorder %s21, 0
      %p235 = por %p233, %p234
      %p236 = scmp.ne.s32.totalorder %s225, %s228
      %p237 = scmp.eq.s32.totalorder %s26, 3
      %p238 = por %p236, %p237
      %p239 = scmp.ne.s32.totalorder %s228, %s229
      %p240 = scmp.eq.s32.totalorder %s26, 0
      %p241 = por %p239, %p240
      %p242 = scmp.ne.s32.totalorder %s228, %s229
      %p243 = scmp.eq.s32.totalorder %s27, 3
      %p244 = por %p242, %p243
      %p246 = scmp.ne.s32.totalorder %s229, %s245
      %p247 = scmp.eq.s32.totalorder %s27, 0
      %p248 = por %p246, %p247
      %s249 = ssub.s32 %s29, %s36
      %p250 = scmp.eq.s32.totalorder %s249, 0
      %s252 = sadd.s32 %s251, 1
      %s253 = scalar_select %p250, %s251, %s252
      %p256 = pneg %p250
      %p257 = scmp.eq.s32.totalorder %s21, 3
      %p258 = por %p256, %p257
      %p259 = scmp.ne.s32.totalorder %s251, %s254
      %p260 = scmp.eq.s32.totalorder %s21, 0
      %p261 = por %p259, %p260
      %p262 = scmp.ne.s32.totalorder %s251, %s254
      %p263 = scmp.eq.s32.totalorder %s26, 3
      %p264 = por %p262, %p263
      %p265 = scmp.ne.s32.totalorder %s254, %s255
      %p266 = scmp.eq.s32.totalorder %s26, 0
      %p267 = por %p265, %p266
      %p268 = scmp.ne.s32.totalorder %s254, %s255
      %p269 = scmp.eq.s32.totalorder %s27, 3
      %p270 = por %p268, %p269
      %p272 = scmp.ne.s32.totalorder %s255, %s271
      %p273 = scmp.eq.s32.totalorder %s27, 0
      %p274 = por %p272, %p273
      %s275 = ssub.s32 %s29, %s36
      %p276 = scmp.eq.s32.totalorder %s275, 0
      %s278 = sadd.s32 %s277, 1
      %s279 = scalar_select %p276, %s277, %s278
      %p282 = pneg %p276
      %p283 = scmp.eq.s32.totalorder %s21, 3
      %p284 = por %p282, %p283
      %p285 = scmp.ne.s32.totalorder %s277, %s280
      %p286 = scmp.eq.s32.totalorder %s21, 0
      %p287 = por %p285, %p286
      %p288 = scmp.ne.s32.totalorder %s277, %s280
      %p289 = scmp.eq.s32.totalorder %s26, 3
      %p290 = por %p288, %p289
      %p291 = scmp.ne.s32.totalorder %s280, %s281
      %p292 = scmp.eq.s32.totalorder %s26, 0
      %p293 = por %p291, %p292
      %p294 = scmp.ne.s32.totalorder %s280, %s281
      %p295 = scmp.eq.s32.totalorder %s27, 3
      %p296 = por %p294, %p295
      %p298 = scmp.ne.s32.totalorder %s281, %s297
      %p299 = scmp.eq.s32.totalorder %s27, 0
      %p300 = por %p298, %p299
      %s301 = ssub.s32 %s29, %s36
      %p302 = scmp.eq.s32.totalorder %s301, 0
      %s304 = sadd.s32 %s303, 1
      %s305 = scalar_select %p302, %s303, %s304
      %p308 = pneg %p302
      %p309 = scmp.eq.s32.totalorder %s21, 3
      %p310 = por %p308, %p309
      %p311 = scmp.ne.s32.totalorder %s303, %s306
      %p312 = scmp.eq.s32.totalorder %s21, 0
      %p313 = por %p311, %p312
      %p314 = scmp.ne.s32.totalorder %s303, %s306
      %p315 = scmp.eq.s32.totalorder %s26, 3
      %p316 = por %p314, %p315
      %p317 = scmp.ne.s32.totalorder %s306, %s307
      %p318 = scmp.eq.s32.totalorder %s26, 0
      %p319 = por %p317, %p318
      %p320 = scmp.ne.s32.totalorder %s306, %s307
      %p321 = scmp.eq.s32.totalorder %s27, 3
      %p322 = por %p320, %p321
      %p324 = scmp.ne.s32.totalorder %s307, %s323
      %p325 = scmp.eq.s32.totalorder %s27, 0
      %p326 = por %p324, %p325
      %s327 = ssub.s32 %s29, %s36
      %p328 = scmp.eq.s32.totalorder %s327, 0
      %s330 = sadd.s32 %s329, 1
      %s331 = scalar_select %p328, %s329, %s330
      %p334 = pneg %p328
      %p335 = scmp.eq.s32.totalorder %s21, 3
      %p336 = por %p334, %p335
      %p337 = scmp.ne.s32.totalorder %s329, %s332
      %p338 = scmp.eq.s32.totalorder %s21, 0
      %p339 = por %p337, %p338
      %p340 = scmp.ne.s32.totalorder %s329, %s332
      %p341 = scmp.eq.s32.totalorder %s26, 3
      %p342 = por %p340, %p341
      %p343 = scmp.ne.s32.totalorder %s332, %s333
      %p344 = scmp.eq.s32.totalorder %s26, 0
      %p345 = por %p343, %p344
      %p346 = scmp.ne.s32.totalorder %s332, %s333
      %p347 = scmp.eq.s32.totalorder %s27, 3
      %p348 = por %p346, %p347
      %p350 = scmp.ne.s32.totalorder %s333, %s349
      %p351 = scmp.eq.s32.totalorder %s27, 0
      %p352 = por %p350, %p351
      %s353 = ssub.s32 %s28, %s40
      %p354 = scmp.eq.s32.totalorder %s353, 0
      %s356 = sadd.s32 %s355, 1
      %s357 = scalar_select %p354, %s355, %s356
      %p360 = pneg %p354
      %p361 = scmp.eq.s32.totalorder %s21, 3
      %p362 = por %p360, %p361
      %p363 = scmp.ne.s32.totalorder %s355, %s358
      %p364 = scmp.eq.s32.totalorder %s21, 0
      %p365 = por %p363, %p364
      %p366 = scmp.ne.s32.totalorder %s355, %s358
      %p367 = scmp.eq.s32.totalorder %s26, 3
      %p368 = por %p366, %p367
      %p369 = scmp.ne.s32.totalorder %s358, %s359
      %p370 = scmp.eq.s32.totalorder %s26, 0
      %p371 = por %p369, %p370
      %p372 = scmp.ne.s32.totalorder %s358, %s359
      %p373 = scmp.eq.s32.totalorder %s27, 3
      %p374 = por %p372, %p373
      %p376 = scmp.ne.s32.totalorder %s359, %s375
      %p377 = scmp.eq.s32.totalorder %s27, 0
      %p378 = por %p376, %p377
      %p379 = scmp.le.s32.totalorder 1, %s21
      %p380 = scmp.lt.s32.totalorder %s21, 5
      %p381 = pnand %p379, %p380
      %p382 = pneg %p381
      // Predicated region
      $region9: #{tpu_custom_call.1} parent=5 // pred_check
        _
      $region10: #{tpu_custom_call.1} parent=5 // pred_check_branch
        %384 = sbr.rel (%p381) target = $region12
      $region11: #{tpu_custom_call.1} parent=5 // pred_region
        %s385 = ssub.s32 %s21, 1
      $region12: #{tpu_custom_call.1} parent=5 // pred_fallthru
        _
      %p386 = scmp.lt.s32.totalorder %s21, 4
      // Predicated region
      $region13: #{tpu_custom_call.1} parent=5 // pred_check
        %p387 = pneg %p386
      $region14: #{tpu_custom_call.1} parent=5 // pred_check_branch
        %389 = sbr.rel (%p387) target = $region16
      $region15: #{tpu_custom_call.1} parent=5 // pred_region
        // Predicated region
        $region17: #{tpu_custom_call.1} parent=15 // pred_check
          %p390 = pneg %p53
        $region18: #{tpu_custom_call.1} parent=15 // pred_check_branch
          %392 = sbr.rel (%p390) target = $region20
        $region19: #{tpu_custom_call.1} parent=15 // pred_region
          %p393 = scmp.lt.s32.totalorder %s28, 1
          %s394 = scalar_select %p393, %s28, 1
          %s395 = smul.addr %s394, 8
          %s396 = scalar_lea.vmem %s0, %s395
        $region20: #{tpu_custom_call.1} parent=15 // pred_fallthru
          _
        // Predicated region
        $region21: #{tpu_custom_call.1} parent=15 // pred_check
          %p397 = pneg %p79
        $region22: #{tpu_custom_call.1} parent=15 // pred_check_branch
          %399 = sbr.rel (%p397) target = $region24
        $region23: #{tpu_custom_call.1} parent=15 // pred_region
          %p400 = scmp.lt.s32.totalorder %s29, 1
          %s401 = scalar_select %p400, %s29, 1
          %s402 = scalar_lea.vmem %s1, %s401
        $region24: #{tpu_custom_call.1} parent=15 // pred_fallthru
          _
        // Predicated region
        $region25: #{tpu_custom_call.1} parent=15 // pred_check
          %p403 = pneg %p105
        $region26: #{tpu_custom_call.1} parent=15 // pred_check_branch
          %405 = sbr.rel (%p403) target = $region28
        $region27: #{tpu_custom_call.1} parent=15 // pred_region
          %p406 = scmp.lt.s32.totalorder %s29, 1
          %s407 = scalar_select %p406, %s29, 1
          %s408 = scalar_lea.vmem %s2, %s407
        $region28: #{tpu_custom_call.1} parent=15 // pred_fallthru
          _
        // Predicated region
        $region29: #{tpu_custom_call.1} parent=15 // pred_check
          %p409 = pneg %p131
        $region30: #{tpu_custom_call.1} parent=15 // pred_check_branch
          %411 = sbr.rel (%p409) target = $region32
        $region31: #{tpu_custom_call.1} parent=15 // pred_region
          %p412 = scmp.lt.s32.totalorder %s29, 1
          %s413 = scalar_select %p412, %s29, 1
          %s414 = smul.addr %s413, 48
          %s415 = smul.addr %s414, 4
          %s416 = scalar_lea.vmem %s3, %s415
        $region32: #{tpu_custom_call.1} parent=15 // pred_fallthru
          _
        // Predicated region
        $region33: #{tpu_custom_call.1} parent=15 // pred_check
          %p417 = pneg %p157
        $region34: #{tpu_custom_call.1} parent=15 // pred_check_branch
          %419 = sbr.rel (%p417) target = $region36
        $region35: #{tpu_custom_call.1} parent=15 // pred_region
          %p420 = scmp.lt.s32.totalorder %s29, 1
          %s421 = scalar_select %p420, %s29, 1
          %s422 = smul.addr %s421, 8
          %s423 = smul.addr %s422, 4
          %s424 = scalar_lea.vmem %s4, %s423
        $region36: #{tpu_custom_call.1} parent=15 // pred_fallthru
          _
        // Predicated region
        $region37: #{tpu_custom_call.1} parent=15 // pred_check
          %p425 = pneg %p183
        $region38: #{tpu_custom_call.1} parent=15 // pred_check_branch
          %427 = sbr.rel (%p425) target = $region40
        $region39: #{tpu_custom_call.1} parent=15 // pred_region
          %p428 = scmp.lt.s32.totalorder %s29, 1
          %s429 = scalar_select %p428, %s29, 1
          %s430 = scalar_lea.vmem %s5, %s429
        $region40: #{tpu_custom_call.1} parent=15 // pred_fallthru
          _
        // Predicated region
        $region41: #{tpu_custom_call.1} parent=15 // pred_check
          %p431 = pneg %p209
        $region42: #{tpu_custom_call.1} parent=15 // pred_check_branch
          %433 = sbr.rel (%p431) target = $region44
        $region43: #{tpu_custom_call.1} parent=15 // pred_region
          %p434 = scmp.lt.s32.totalorder %s29, 1
          %s435 = scalar_select %p434, %s29, 1
          %s436 = scalar_lea.vmem %s6, %s435
        $region44: #{tpu_custom_call.1} parent=15 // pred_fallthru
          _
        // Predicated region
        $region45: #{tpu_custom_call.1} parent=15 // pred_check
          %p437 = pneg %p235
        $region46: #{tpu_custom_call.1} parent=15 // pred_check_branch
          %439 = sbr.rel (%p437) target = $region48
        $region47: #{tpu_custom_call.1} parent=15 // pred_region
          %p440 = scmp.lt.s32.totalorder %s29, 1
          %s441 = scalar_select %p440, %s29, 1
          %s442 = scalar_lea.vmem %s7, %s441
        $region48: #{tpu_custom_call.1} parent=15 // pred_fallthru
          _
        // Predicated region
        $region49: #{tpu_custom_call.1} parent=15 // pred_check
          %p443 = pneg %p261
        $region50: #{tpu_custom_call.1} parent=15 // pred_check_branch
          %445 = sbr.rel (%p443) target = $region52
        $region51: #{tpu_custom_call.1} parent=15 // pred_region
          %p446 = scmp.lt.s32.totalorder %s29, 1
          %s447 = scalar_select %p446, %s29, 1
          %s448 = smul.addr %s447, 4
          %s449 = smul.addr %s448, 4
          %s450 = scalar_lea.vmem %s8, %s449
        $region52: #{tpu_custom_call.1} parent=15 // pred_fallthru
          _
        // Predicated region
        $region53: #{tpu_custom_call.1} parent=15 // pred_check
          %p451 = pneg %p287
        $region54: #{tpu_custom_call.1} parent=15 // pred_check_branch
          %453 = sbr.rel (%p451) target = $region56
        $region55: #{tpu_custom_call.1} parent=15 // pred_region
          %p454 = scmp.lt.s32.totalorder %s29, 1
          %s455 = scalar_select %p454, %s29, 1
          %s456 = scalar_lea.vmem %s9, %s455
        $region56: #{tpu_custom_call.1} parent=15 // pred_fallthru
          _
        // Predicated region
        $region57: #{tpu_custom_call.1} parent=15 // pred_check
          %p457 = pneg %p313
        $region58: #{tpu_custom_call.1} parent=15 // pred_check_branch
          %459 = sbr.rel (%p457) target = $region60
        $region59: #{tpu_custom_call.1} parent=15 // pred_region
          %p460 = scmp.lt.s32.totalorder %s29, 1
          %s461 = scalar_select %p460, %s29, 1
          %s462 = smul.addr %s461, 8
          %s463 = smul.addr %s462, 4
          %s464 = scalar_lea.vmem %s10, %s463
        $region60: #{tpu_custom_call.1} parent=15 // pred_fallthru
          _
        // Predicated region
        $region61: #{tpu_custom_call.1} parent=15 // pred_check
          %p465 = pneg %p339
        $region62: #{tpu_custom_call.1} parent=15 // pred_check_branch
          %467 = sbr.rel (%p465) target = $region64
        $region63: #{tpu_custom_call.1} parent=15 // pred_region
          %p468 = scmp.lt.s32.totalorder %s29, 1
          %s469 = scalar_select %p468, %s29, 1
          %s470 = scalar_lea.vmem %s11, %s469
        $region64: #{tpu_custom_call.1} parent=15 // pred_fallthru
          _
      $region16: #{tpu_custom_call.1} parent=5 // pred_fallthru
        _
      %p471 = scmp.le.s32.totalorder 1, %s21
      %p472 = scmp.lt.s32.totalorder %s21, 5
      %p473 = pnand %p471, %p472
      %p474 = pneg %p473
      // Predicated region
      $region65: #{tpu_custom_call.1} parent=5 // pred_check
        _
      $region66: #{tpu_custom_call.1} parent=5 // pred_check_branch
        %476 = sbr.rel (%p473) target = $region68
      $region67: #{tpu_custom_call.1} parent=5 // pred_region
        %s477 = ssub.s32 %s21, 1
        %p478 = scmp.lt.s32.totalorder %s30, 1
        %s479 = scalar_select %p478, %s30, 1
        %s480 = smul.addr %s479, 8
        %s481 = scalar_lea.vmem %s0, %s480
        %p482 = pneg %p59
        %p483 = pneg %p56
        %p484 = scmp.lt.s32.totalorder %s31, 1
        %s485 = scalar_select %p484, %s31, 1
        %s486 = scalar_lea.vmem %s1, %s485
        %p487 = pneg %p85
        %p488 = pneg %p82
        %p489 = scmp.lt.s32.totalorder %s31, 1
        %s490 = scalar_select %p489, %s31, 1
        %s491 = scalar_lea.vmem %s2, %s490
        %p492 = pneg %p111
        %p493 = pneg %p108
        %p494 = scmp.lt.s32.totalorder %s31, 1
        %s495 = scalar_select %p494, %s31, 1
        %s496 = smul.addr %s495, 48
        %s497 = smul.addr %s496, 4
        %s498 = scalar_lea.vmem %s3, %s497
        %p499 = pneg %p137
        %p500 = pneg %p134
        %p501 = scmp.lt.s32.totalorder %s31, 1
        %s502 = scalar_select %p501, %s31, 1
        %s503 = smul.addr %s502, 8
        %s504 = smul.addr %s503, 4
        %s505 = scalar_lea.vmem %s4, %s504
        %p506 = pneg %p163
        %p507 = pneg %p160
        %p508 = scmp.lt.s32.totalorder %s31, 1
        %s509 = scalar_select %p508, %s31, 1
        %s510 = scalar_lea.vmem %s5, %s509
        %p511 = pneg %p189
        %p512 = pneg %p186
        %p513 = scmp.lt.s32.totalorder %s31, 1
        %s514 = scalar_select %p513, %s31, 1
        %s515 = scalar_lea.vmem %s6, %s514
        %p516 = pneg %p215
        %p517 = pneg %p212
        %p518 = scmp.lt.s32.totalorder %s31, 1
        %s519 = scalar_select %p518, %s31, 1
        %s520 = scalar_lea.vmem %s7, %s519
        %p521 = pneg %p241
        %p522 = pneg %p238
        %p523 = scmp.lt.s32.totalorder %s31, 1
        %s524 = scalar_select %p523, %s31, 1
        %s525 = smul.addr %s524, 4
        %s526 = smul.addr %s525, 4
        %s527 = scalar_lea.vmem %s8, %s526
        %p528 = pneg %p267
        %p529 = pneg %p264
        %p530 = scmp.lt.s32.totalorder %s31, 1
        %s531 = scalar_select %p530, %s31, 1
        %s532 = scalar_lea.vmem %s9, %s531
        %p533 = pneg %p293
        %p534 = pneg %p290
        %p535 = scmp.lt.s32.totalorder %s31, 1
        %s536 = scalar_select %p535, %s31, 1
        %s537 = smul.addr %s536, 8
        %s538 = smul.addr %s537, 4
        %s539 = scalar_lea.vmem %s10, %s538
        %p540 = pneg %p319
        %p541 = pneg %p316
        %p542 = scmp.lt.s32.totalorder %s31, 1
        %s543 = scalar_select %p542, %s31, 1
        %s544 = scalar_lea.vmem %s11, %s543
        %p545 = pneg %p345
        %p546 = pneg %p342
        %p547 = pneg %p371
        %p548 = pneg %p368
        %s549 = sand.u32 %s358, 1
        %s550 = scalar_lea.sflag [#allocation4], %s549
        %s551 = sand.u32 %s358, 1
        %s552 = smul.addr %s551, 8
        %s553 = scalar_lea.vmem [#allocation3], %s552
        %p554 = scmp.lt.s32.totalorder %s30, 1
        %s555 = scalar_select %p554, %s30, 1
        %s556 = smul.addr %s555, 8
        %s557 = scalar_lea.vmem %s0, %s556
        %p558 = scmp.lt.s32.totalorder %s31, 1
        %s559 = scalar_select %p558, %s31, 1
        %s560 = scalar_lea.vmem %s1, %s559
        %p561 = scmp.lt.s32.totalorder %s31, 1
        %s562 = scalar_select %p561, %s31, 1
        %s563 = scalar_lea.vmem %s2, %s562
        %p564 = scmp.lt.s32.totalorder %s31, 1
        %s565 = scalar_select %p564, %s31, 1
        %s566 = smul.addr %s565, 48
        %s567 = smul.addr %s566, 4
        %s568 = scalar_lea.vmem %s3, %s567
        %p569 = scmp.lt.s32.totalorder %s31, 1
        %s570 = scalar_select %p569, %s31, 1
        %s571 = smul.addr %s570, 8
        %s572 = smul.addr %s571, 4
        %s573 = scalar_lea.vmem %s4, %s572
        %p574 = scmp.lt.s32.totalorder %s31, 1
        %s575 = scalar_select %p574, %s31, 1
        %s576 = scalar_lea.vmem %s5, %s575
        %p577 = scmp.lt.s32.totalorder %s31, 1
        %s578 = scalar_select %p577, %s31, 1
        %s579 = scalar_lea.vmem %s6, %s578
        %p580 = scmp.lt.s32.totalorder %s31, 1
        %s581 = scalar_select %p580, %s31, 1
        %s582 = scalar_lea.vmem %s7, %s581
        %p583 = scmp.lt.s32.totalorder %s31, 1
        %s584 = scalar_select %p583, %s31, 1
        %s585 = smul.addr %s584, 4
        %s586 = smul.addr %s585, 4
        %s587 = scalar_lea.vmem %s8, %s586
        %p588 = scmp.lt.s32.totalorder %s31, 1
        %s589 = scalar_select %p588, %s31, 1
        %s590 = scalar_lea.vmem %s9, %s589
        %p591 = scmp.lt.s32.totalorder %s31, 1
        %s592 = scalar_select %p591, %s31, 1
        %s593 = smul.addr %s592, 8
        %s594 = smul.addr %s593, 4
        %s595 = scalar_lea.vmem %s10, %s594
        %p596 = scmp.lt.s32.totalorder %s31, 1
        %s597 = scalar_select %p596, %s31, 1
        %s598 = scalar_lea.vmem %s11, %s597
        %p600 = scmp.eq.s32.totalorder %s31, 0
        // Predicated region
        $region69: #{tpu_custom_call.1} parent=67 // pred_check
          %p601 = pneg %p600
        $region70: #{tpu_custom_call.1} parent=67 // pred_check_branch
          %603 = sbr.rel (%p601) target = $region72
        $region71: #{tpu_custom_call.1} parent=67 // pred_region
          %v604 = vld [vmem:[%s557] sm:$0xff]
          %vm605 = vcmask 261120
          %606 = vst.msk [vmem:[#allocation2] sm:$0xff] %vm605, %v604
        $region72: #{tpu_custom_call.1} parent=67 // pred_fallthru
          _
        %v607 = vld [vmem:[#allocation2] sm:$0xff]
        %v608 = vld [vmem:[%s560] sm:$0x1]
        %v609 = vld [vmem:[%s563] sm:$0x1]
        %vm610 = vcmask 261120
        %v611 = vsel %vm610, %v607, 0.0
        %612 = vadd.xlane.f32.xlu0 %v611
        %v613 = vpop.xlane.xlu0 %612
        %v614 = vrcp.pop 32.0
        %v615 = vmul.f32 %v613, %v614
        %v616 = vsub.f32 %v607, %v615
        %v617 = vmul.f32 %v616, %v616
        %v618 = vsel %vm610, %v617, 0.0
        %619 = vadd.xlane.f32.xlu0 %v618
        %v620 = vpop.xlane.xlu0 %619
        %v621 = vmul.f32 %v620, %v614
        %v622 = vadd.f32 %v621, 1e-05
        %v623 = vrsqrt.pop %v622
        %v624 = vmul.f32 %v616, %v623
        %v626 = vlaneseq
        %v627 = vshrl.u32 %v626, 7
        %v628 = vsub.s32 0, %v627
        %v629 = vrot.slane %v608, %v628
        %v631 = vmul.f32 %v624, %v629
        %v633 = vlaneseq
        %v634 = vshrl.u32 %v633, 7
        %v635 = vsub.s32 0, %v634
        %v636 = vrot.slane %v609, %v635
        %v638 = vadd.f32 %v631, %v636
        %v639 = vpack.c.bf16 %v638, %v638
        %v640 = vld [vmem:[%s568] sm:$0xf]
        %v641 = vld [vmem:[%s568 + $0x4] sm:$0xf]
        %v642 = vld [vmem:[%s568 + $0x8] sm:$0xf]
        %v643 = vld [vmem:[%s568 + $0xc] sm:$0xf]
        %v648 = vunpack.c.l.b16 %v640
        %v649 = vunpack.c.l.b16 %v641
        %v650 = vunpack.c.l.b16 %v642
        %v651 = vunpack.c.l.b16 %v643
        %v652 = vpack.c.b16 %v649, %v648
        %v653 = vpack.c.b16 %v651, %v650
        %v657 = vsel %vm610, %v639, 0
        %659 = vmatprep.subr.bf16.mxu0 0
        %660 = vmatpush1.bf16.msra.mxu0 %v652
        %661 = vmatprep.subr.bf16.mxu0 0
        %662 = vmatpush1.bf16.msra.mxu0 %v653
        %663 = vmatprep.subr.bf16.mxu0 0
        %664 = vmatpush1.bf16.msra.mxu0 0
        %665 = vmatprep.subr.bf16.mxu0 0
        %666 = vmatpush1.bf16.msra.mxu0 0
        %667 = vmatprep.subr.bf16.mxu0 0
        %668 = vmatpush1.bf16.msra.mxu0 0
        %669 = vmatprep.subr.bf16.mxu0 0
        %670 = vmatpush1.bf16.msra.mxu0 0
        %671 = vmatprep.subr.bf16.mxu0 0
        %672 = vmatpush1.bf16.msra.mxu0 0
        %673 = vmatprep.subr.bf16.mxu0 0
        %674 = vmatpush1.bf16.msra.mxu0 0
        %675 = vmatprep.subr.bf16.mxu0 0
        %676 = vmatpush1.bf16.msra.mxu0 0
        %677 = vmatprep.subr.bf16.mxu0 0
        %678 = vmatpush1.bf16.msra.mxu0 0
        %679 = vmatprep.subr.bf16.mxu0 0
        %680 = vmatpush1.bf16.msra.mxu0 0
        %681 = vmatprep.subr.bf16.mxu0 0
        %682 = vmatpush1.bf16.msra.mxu0 0
        %683 = vmatprep.subr.bf16.mxu0 0
        %684 = vmatpush1.bf16.msra.mxu0 0
        %685 = vmatprep.subr.bf16.mxu0 0
        %686 = vmatpush1.bf16.msra.mxu0 0
        %687 = vmatprep.subr.bf16.mxu0 0
        %688 = vmatpush1.bf16.msra.mxu0 0
        %689 = vmatprep.subr.bf16.mxu0 0
        %690 = vmatpush1.bf16.msra.mxu0 0
        %691 = vmatprep.mubr.bf16.mxu0 0
        %692 = vmatmul.mubr.bf16.gmra.mrb[0].mxu0 %v657
        %v693 = vpop.f32.mrb[0].mxu0
        %v694 = vadd.f32 0.0, %v693
        %v695 = vpop.f32.mrb[0].mxu0
        %v696 = vpop.f32.mrb[0].mxu0
        %v697 = vpop.f32.mrb[0].mxu0
        %698 = vdwg.mxu0
        %s699 = scalar_lea.vmem %s568, 64
        %v700 = vld [vmem:[%s699] sm:$0xf]
        %v701 = vld [vmem:[%s699 + $0x4] sm:$0xf]
        %v702 = vld [vmem:[%s699 + $0x8] sm:$0xf]
        %v703 = vld [vmem:[%s699 + $0xc] sm:$0xf]
        %v708 = vunpack.c.l.b16 %v700
        %v709 = vunpack.c.l.b16 %v701
        %v710 = vunpack.c.l.b16 %v702
        %v711 = vunpack.c.l.b16 %v703
        %v712 = vpack.c.b16 %v709, %v708
        %v713 = vpack.c.b16 %v711, %v710
        %716 = vmatprep.subr.bf16.mxu0 0
        %717 = vmatpush1.bf16.msra.mxu0 %v712
        %718 = vmatprep.subr.bf16.mxu0 0
        %719 = vmatpush1.bf16.msra.mxu0 %v713
        %720 = vmatprep.subr.bf16.mxu0 0
        %721 = vmatpush1.bf16.msra.mxu0 0
        %722 = vmatprep.subr.bf16.mxu0 0
        %723 = vmatpush1.bf16.msra.mxu0 0
        %724 = vmatprep.subr.bf16.mxu0 0
        %725 = vmatpush1.bf16.msra.mxu0 0
        %726 = vmatprep.subr.bf16.mxu0 0
        %727 = vmatpush1.bf16.msra.mxu0 0
        %728 = vmatprep.subr.bf16.mxu0 0
        %729 = vmatpush1.bf16.msra.mxu0 0
        %730 = vmatprep.subr.bf16.mxu0 0
        %731 = vmatpush1.bf16.msra.mxu0 0
        %732 = vmatprep.subr.bf16.mxu0 0
        %733 = vmatpush1.bf16.msra.mxu0 0
        %734 = vmatprep.subr.bf16.mxu0 0
        %735 = vmatpush1.bf16.msra.mxu0 0
        %736 = vmatprep.subr.bf16.mxu0 0
        %737 = vmatpush1.bf16.msra.mxu0 0
        %738 = vmatprep.subr.bf16.mxu0 0
        %739 = vmatpush1.bf16.msra.mxu0 0
        %740 = vmatprep.subr.bf16.mxu0 0
        %741 = vmatpush1.bf16.msra.mxu0 0
        %742 = vmatprep.subr.bf16.mxu0 0
        %743 = vmatpush1.bf16.msra.mxu0 0
        %744 = vmatprep.subr.bf16.mxu0 0
        %745 = vmatpush1.bf16.msra.mxu0 0
        %746 = vmatprep.subr.bf16.mxu0 0
        %747 = vmatpush1.bf16.msra.mxu0 0
        %748 = vmatprep.mubr.bf16.mxu0 0
        %749 = vmatmul.mubr.bf16.gmra.mrb[0].mxu0 %v657
        %v750 = vpop.f32.mrb[0].mxu0
        %v751 = vadd.f32 0.0, %v750
        %v752 = vpop.f32.mrb[0].mxu0
        %v753 = vpop.f32.mrb[0].mxu0
        %v754 = vpop.f32.mrb[0].mxu0
        %755 = vdwg.mxu0
        %s756 = scalar_lea.vmem %s568, 128
        %v757 = vld [vmem:[%s756] sm:$0xf]
        %v758 = vld [vmem:[%s756 + $0x4] sm:$0xf]
        %v759 = vld [vmem:[%s756 + $0x8] sm:$0xf]
        %v760 = vld [vmem:[%s756 + $0xc] sm:$0xf]
        %v765 = vunpack.c.l.b16 %v757
        %v766 = vunpack.c.l.b16 %v758
        %v767 = vunpack.c.l.b16 %v759
        %v768 = vunpack.c.l.b16 %v760
        %v769 = vpack.c.b16 %v766, %v765
        %v770 = vpack.c.b16 %v768, %v767
        %773 = vmatprep.subr.bf16.mxu0 0
        %774 = vmatpush1.bf16.msra.mxu0 %v769
        %775 = vmatprep.subr.bf16.mxu0 0
        %776 = vmatpush1.bf16.msra.mxu0 %v770
        %777 = vmatprep.subr.bf16.mxu0 0
        %778 = vmatpush1.bf16.msra.mxu0 0
        %779 = vmatprep.subr.bf16.mxu0 0
        %780 = vmatpush1.bf16.msra.mxu0 0
        %781 = vmatprep.subr.bf16.mxu0 0
        %782 = vmatpush1.bf16.msra.mxu0 0
        %783 = vmatprep.subr.bf16.mxu0 0
        %784 = vmatpush1.bf16.msra.mxu0 0
        %785 = vmatprep.subr.bf16.mxu0 0
        %786 = vmatpush1.bf16.msra.mxu0 0
        %787 = vmatprep.subr.bf16.mxu0 0
        %788 = vmatpush1.bf16.msra.mxu0 0
        %789 = vmatprep.subr.bf16.mxu0 0
        %790 = vmatpush1.bf16.msra.mxu0 0
        %791 = vmatprep.subr.bf16.mxu0 0
        %792 = vmatpush1.bf16.msra.mxu0 0
        %793 = vmatprep.subr.bf16.mxu0 0
        %794 = vmatpush1.bf16.msra.mxu0 0
        %795 = vmatprep.subr.bf16.mxu0 0
        %796 = vmatpush1.bf16.msra.mxu0 0
        %797 = vmatprep.subr.bf16.mxu0 0
        %798 = vmatpush1.bf16.msra.mxu0 0
        %799 = vmatprep.subr.bf16.mxu0 0
        %800 = vmatpush1.bf16.msra.mxu0 0
        %801 = vmatprep.subr.bf16.mxu0 0
        %802 = vmatpush1.bf16.msra.mxu0 0
        %803 = vmatprep.subr.bf16.mxu0 0
        %804 = vmatpush1.bf16.msra.mxu0 0
        %805 = vmatprep.mubr.bf16.mxu0 0
        %806 = vmatmul.mubr.bf16.gmra.mrb[0].mxu0 %v657
        %v807 = vpop.f32.mrb[0].mxu0
        %v808 = vadd.f32 0.0, %v807
        %v809 = vpop.f32.mrb[0].mxu0
        %v810 = vpop.f32.mrb[0].mxu0
        %v811 = vpop.f32.mrb[0].mxu0
        %812 = vdwg.mxu0
        %v813 = vpack.c.bf16 %v694, %v694
        %v814 = vpack.c.bf16 %v751, %v751
        %vm815 = vcmask 130048
        %v817 = vsel %vm815, %v813, 0
        %v820 = vsel %vm815, %v814, 0
        %822 = vmatprep.subr.bf16.mxu0 0
        %823 = vmatpush1.bf16.xpose.msra.mxu0 %v820
        %824 = vmatprep.subr.bf16.mxu0 0
        %825 = vmatpush1.bf16.xpose.msra.mxu0 0
        %826 = vmatprep.subr.bf16.mxu0 0
        %827 = vmatpush1.bf16.xpose.msra.mxu0 0
        %828 = vmatprep.subr.bf16.mxu0 0
        %829 = vmatpush1.bf16.xpose.msra.mxu0 0
        %830 = vmatprep.subr.bf16.mxu0 0
        %831 = vmatpush1.bf16.xpose.msra.mxu0 0
        %832 = vmatprep.subr.bf16.mxu0 0
        %833 = vmatpush1.bf16.xpose.msra.mxu0 0
        %834 = vmatprep.subr.bf16.mxu0 0
        %835 = vmatpush1.bf16.xpose.msra.mxu0 0
        %836 = vmatprep.subr.bf16.mxu0 0
        %837 = vmatpush1.bf16.xpose.msra.mxu0 0
        %838 = vmatprep.subr.bf16.mxu0 0
        %839 = vmatpush1.bf16.xpose.msra.mxu0 0
        %840 = vmatprep.subr.bf16.mxu0 0
        %841 = vmatpush1.bf16.xpose.msra.mxu0 0
        %842 = vmatprep.subr.bf16.mxu0 0
        %843 = vmatpush1.bf16.xpose.msra.mxu0 0
        %844 = vmatprep.subr.bf16.mxu0 0
        %845 = vmatpush1.bf16.xpose.msra.mxu0 0
        %846 = vmatprep.subr.bf16.mxu0 0
        %847 = vmatpush1.bf16.xpose.msra.mxu0 0
        %848 = vmatprep.subr.bf16.mxu0 0
        %849 = vmatpush1.bf16.xpose.msra.mxu0 0
        %850 = vmatprep.subr.bf16.mxu0 0
        %851 = vmatpush1.bf16.xpose.msra.mxu0 0
        %852 = vmatprep.subr.bf16.mxu0 0
        %853 = vmatpush1.bf16.xpose.msra.mxu0 0
        %854 = vmatprep.mubr.bf16.mxu0 0
        %855 = vmatmul.mubr.bf16.gmra.mrb[0].mxu0 %v817
        %v856 = vpop.f32.mrb[0].mxu0
        %v857 = vadd.f32 0.0, %v856
        %v858 = vpop.f32.mrb[0].mxu0
        %v859 = vpop.f32.mrb[0].mxu0
        %v860 = vpop.f32.mrb[0].mxu0
        %861 = vdwg.mxu0
        %vm862 = vcmask 64512
        %v863 = vsel %vm862, %v857, -inf
        %864 = vmax.xlane.f32.xlu0 %v863
        %v865 = vpop.xlane.xlu0 %864
        %v866 = vsub.f32 %v857, %v865
        %v867 = vmul.f32 %v866, 1.442695
        %v868 = vpow.pop %v867
        %v869 = vsel %vm862, %v868, 0.0
        %870 = vadd.xlane.f32.xlu0 %v869
        %v871 = vpop.xlane.xlu0 %870
        %v872 = vrcp.pop %v871
        %v873 = vmul.f32 %v868, %v872
        %v874 = vpack.c.bf16 %v873, %v873
        %v875 = vpack.c.bf16 %v808, %v808
        %v877 = vsel %vm862, %v874, 0
        %vm879 = vcmask 1043456
        %v881 = vsel %vm879, %v875, 0
        %883 = vmatprep.subr.bf16.mxu0 0
        %884 = vmatpush1.bf16.msra.mxu0 %v881
        %885 = vmatprep.subr.bf16.mxu0 0
        %886 = vmatpush1.bf16.msra.mxu0 0
        %887 = vmatprep.subr.bf16.mxu0 0
        %888 = vmatpush1.bf16.msra.mxu0 0
        %889 = vmatprep.subr.bf16.mxu0 0
        %890 = vmatpush1.bf16.msra.mxu0 0
        %891 = vmatprep.subr.bf16.mxu0 0
        %892 = vmatpush1.bf16.msra.mxu0 0
        %893 = vmatprep.subr.bf16.mxu0 0
        %894 = vmatpush1.bf16.msra.mxu0 0
        %895 = vmatprep.subr.bf16.mxu0 0
        %896 = vmatpush1.bf16.msra.mxu0 0
        %897 = vmatprep.subr.bf16.mxu0 0
        %898 = vmatpush1.bf16.msra.mxu0 0
        %899 = vmatprep.subr.bf16.mxu0 0
        %900 = vmatpush1.bf16.msra.mxu0 0
        %901 = vmatprep.subr.bf16.mxu0 0
        %902 = vmatpush1.bf16.msra.mxu0 0
        %903 = vmatprep.subr.bf16.mxu0 0
        %904 = vmatpush1.bf16.msra.mxu0 0
        %905 = vmatprep.subr.bf16.mxu0 0
        %906 = vmatpush1.bf16.msra.mxu0 0
        %907 = vmatprep.subr.bf16.mxu0 0
        %908 = vmatpush1.bf16.msra.mxu0 0
        %909 = vmatprep.subr.bf16.mxu0 0
        %910 = vmatpush1.bf16.msra.mxu0 0
        %911 = vmatprep.subr.bf16.mxu0 0
        %912 = vmatpush1.bf16.msra.mxu0 0
        %913 = vmatprep.subr.bf16.mxu0 0
        %914 = vmatpush1.bf16.msra.mxu0 0
        %915 = vmatprep.mubr.bf16.mxu0 0
        %916 = vmatmul.mubr.bf16.gmra.mrb[0].mxu0 %v877
        %v917 = vpop.f32.mrb[0].mxu0
        %v918 = vadd.f32 0.0, %v917
        %v919 = vpop.f32.mrb[0].mxu0
        %v920 = vpop.f32.mrb[0].mxu0
        %v921 = vpop.f32.mrb[0].mxu0
        %922 = vdwg.mxu0
        %v923 = vpack.c.bf16 %v918, %v918
        %v924 = vld [vmem:[%s573] sm:$0xf]
        %v925 = vld [vmem:[%s573 + $0x4] sm:$0xf]
        %s926 = scalar_lea.vmem %s568, 16
        %v927 = vld [vmem:[%s926] sm:$0xf]
        %v928 = vld [vmem:[%s926 + $0x4] sm:$0xf]
        %v929 = vld [vmem:[%s926 + $0x8] sm:$0xf]
        %v930 = vld [vmem:[%s926 + $0xc] sm:$0xf]
        %v935 = vunpack.c.l.b16 %v927
        %v936 = vunpack.c.l.b16 %v928
        %v937 = vunpack.c.l.b16 %v929
        %v938 = vunpack.c.l.b16 %v930
        %v939 = vpack.c.b16 %v936, %v935
        %v940 = vpack.c.b16 %v938, %v937
        %943 = vmatprep.subr.bf16.mxu0 0
        %944 = vmatpush1.bf16.msra.mxu0 %v939
        %945 = vmatprep.subr.bf16.mxu0 0
        %946 = vmatpush1.bf16.msra.mxu0 %v940
        %947 = vmatprep.subr.bf16.mxu0 0
        %948 = vmatpush1.bf16.msra.mxu0 0
        %949 = vmatprep.subr.bf16.mxu0 0
        %950 = vmatpush1.bf16.msra.mxu0 0
        %951 = vmatprep.subr.bf16.mxu0 0
        %952 = vmatpush1.bf16.msra.mxu0 0
        %953 = vmatprep.subr.bf16.mxu0 0
        %954 = vmatpush1.bf16.msra.mxu0 0
        %955 = vmatprep.subr.bf16.mxu0 0
        %956 = vmatpush1.bf16.msra.mxu0 0
        %957 = vmatprep.subr.bf16.mxu0 0
        %958 = vmatpush1.bf16.msra.mxu0 0
        %959 = vmatprep.subr.bf16.mxu0 0
        %960 = vmatpush1.bf16.msra.mxu0 0
        %961 = vmatprep.subr.bf16.mxu0 0
        %962 = vmatpush1.bf16.msra.mxu0 0
        %963 = vmatprep.subr.bf16.mxu0 0
        %964 = vmatpush1.bf16.msra.mxu0 0
        %965 = vmatprep.subr.bf16.mxu0 0
        %966 = vmatpush1.bf16.msra.mxu0 0
        %967 = vmatprep.subr.bf16.mxu0 0
        %968 = vmatpush1.bf16.msra.mxu0 0
        %969 = vmatprep.subr.bf16.mxu0 0
        %970 = vmatpush1.bf16.msra.mxu0 0
        %971 = vmatprep.subr.bf16.mxu0 0
        %972 = vmatpush1.bf16.msra.mxu0 0
        %973 = vmatprep.subr.bf16.mxu0 0
        %974 = vmatpush1.bf16.msra.mxu0 0
        %975 = vmatprep.mubr.bf16.mxu0 0
        %976 = vmatmul.mubr.bf16.gmra.mrb[0].mxu0 %v657
        %v977 = vpop.f32.mrb[0].mxu0
        %v978 = vadd.f32 0.0, %v977
        %v979 = vpop.f32.mrb[0].mxu0
        %v980 = vpop.f32.mrb[0].mxu0
        %v981 = vpop.f32.mrb[0].mxu0
        %982 = vdwg.mxu0
        %s983 = scalar_lea.vmem %s568, 80
        %v984 = vld [vmem:[%s983] sm:$0xf]
        %v985 = vld [vmem:[%s983 + $0x4] sm:$0xf]
        %v986 = vld [vmem:[%s983 + $0x8] sm:$0xf]
        %v987 = vld [vmem:[%s983 + $0xc] sm:$0xf]
        %v992 = vunpack.c.l.b16 %v984
        %v993 = vunpack.c.l.b16 %v985
        %v994 = vunpack.c.l.b16 %v986
        %v995 = vunpack.c.l.b16 %v987
        %v996 = vpack.c.b16 %v993, %v992
        %v997 = vpack.c.b16 %v995, %v994
        %1000 = vmatprep.subr.bf16.mxu0 0
        %1001 = vmatpush1.bf16.msra.mxu0 %v996
        %1002 = vmatprep.subr.bf16.mxu0 0
        %1003 = vmatpush1.bf16.msra.mxu0 %v997
        %1004 = vmatprep.subr.bf16.mxu0 0
        %1005 = vmatpush1.bf16.msra.mxu0 0
        %1006 = vmatprep.subr.bf16.mxu0 0
        %1007 = vmatpush1.bf16.msra.mxu0 0
        %1008 = vmatprep.subr.bf16.mxu0 0
        %1009 = vmatpush1.bf16.msra.mxu0 0
        %1010 = vmatprep.subr.bf16.mxu0 0
        %1011 = vmatpush1.bf16.msra.mxu0 0
        %1012 = vmatprep.subr.bf16.mxu0 0
        %1013 = vmatpush1.bf16.msra.mxu0 0
        %1014 = vmatprep.subr.bf16.mxu0 0
        %1015 = vmatpush1.bf16.msra.mxu0 0
        %1016 = vmatprep.subr.bf16.mxu0 0
        %1017 = vmatpush1.bf16.msra.mxu0 0
        %1018 = vmatprep.subr.bf16.mxu0 0
        %1019 = vmatpush1.bf16.msra.mxu0 0
        %1020 = vmatprep.subr.bf16.mxu0 0
        %1021 = vmatpush1.bf16.msra.mxu0 0
        %1022 = vmatprep.subr.bf16.mxu0 0
        %1023 = vmatpush1.bf16.msra.mxu0 0
        %1024 = vmatprep.subr.bf16.mxu0 0
        %1025 = vmatpush1.bf16.msra.mxu0 0
        %1026 = vmatprep.subr.bf16.mxu0 0
        %1027 = vmatpush1.bf16.msra.mxu0 0
        %1028 = vmatprep.subr.bf16.mxu0 0
        %1029 = vmatpush1.bf16.msra.mxu0 0
        %1030 = vmatprep.subr.bf16.mxu0 0
        %1031 = vmatpush1.bf16.msra.mxu0 0
        %1032 = vmatprep.mubr.bf16.mxu0 0
        %1033 = vmatmul.mubr.bf16.gmra.mrb[0].mxu0 %v657
        %v1034 = vpop.f32.mrb[0].mxu0
        %v1035 = vadd.f32 0.0, %v1034
        %v1036 = vpop.f32.mrb[0].mxu0
        %v1037 = vpop.f32.mrb[0].mxu0
        %v1038 = vpop.f32.mrb[0].mxu0
        %1039 = vdwg.mxu0
        %s1040 = scalar_lea.vmem %s568, 144
        %v1041 = vld [vmem:[%s1040] sm:$0xf]
        %v1042 = vld [vmem:[%s1040 + $0x4] sm:$0xf]
        %v1043 = vld [vmem:[%s1040 + $0x8] sm:$0xf]
        %v1044 = vld [vmem:[%s1040 + $0xc] sm:$0xf]
        %v1049 = vunpack.c.l.b16 %v1041
        %v1050 = vunpack.c.l.b16 %v1042
        %v1051 = vunpack.c.l.b16 %v1043
        %v1052 = vunpack.c.l.b16 %v1044
        %v1053 = vpack.c.b16 %v1050, %v1049
        %v1054 = vpack.c.b16 %v1052, %v1051
        %1057 = vmatprep.subr.bf16.mxu0 0
        %1058 = vmatpush1.bf16.msra.mxu0 %v1053
        %1059 = vmatprep.subr.bf16.mxu0 0
        %1060 = vmatpush1.bf16.msra.mxu0 %v1054
        %1061 = vmatprep.subr.bf16.mxu0 0
        %1062 = vmatpush1.bf16.msra.mxu0 0
        %1063 = vmatprep.subr.bf16.mxu0 0
        %1064 = vmatpush1.bf16.msra.mxu0 0
        %1065 = vmatprep.subr.bf16.mxu0 0
        %1066 = vmatpush1.bf16.msra.mxu0 0
        %1067 = vmatprep.subr.bf16.mxu0 0
        %1068 = vmatpush1.bf16.msra.mxu0 0
        %1069 = vmatprep.subr.bf16.mxu0 0
        %1070 = vmatpush1.bf16.msra.mxu0 0
        %1071 = vmatprep.subr.bf16.mxu0 0
        %1072 = vmatpush1.bf16.msra.mxu0 0
        %1073 = vmatprep.subr.bf16.mxu0 0
        %1074 = vmatpush1.bf16.msra.mxu0 0
        %1075 = vmatprep.subr.bf16.mxu0 0
        %1076 = vmatpush1.bf16.msra.mxu0 0
        %1077 = vmatprep.subr.bf16.mxu0 0
        %1078 = vmatpush1.bf16.msra.mxu0 0
        %1079 = vmatprep.subr.bf16.mxu0 0
        %1080 = vmatpush1.bf16.msra.mxu0 0
        %1081 = vmatprep.subr.bf16.mxu0 0
        %1082 = vmatpush1.bf16.msra.mxu0 0
        %1083 = vmatprep.subr.bf16.mxu0 0
        %1084 = vmatpush1.bf16.msra.mxu0 0
        %1085 = vmatprep.subr.bf16.mxu0 0
        %1086 = vmatpush1.bf16.msra.mxu0 0
        %1087 = vmatprep.subr.bf16.mxu0 0
        %1088 = vmatpush1.bf16.msra.mxu0 0
        %1089 = vmatprep.mubr.bf16.mxu0 0
        %1090 = vmatmul.mubr.bf16.gmra.mrb[0].mxu0 %v657
        %v1091 = vpop.f32.mrb[0].mxu0
        %v1092 = vadd.f32 0.0, %v1091
        %v1093 = vpop.f32.mrb[0].mxu0
        %v1094 = vpop.f32.mrb[0].mxu0
        %v1095 = vpop.f32.mrb[0].mxu0
        %1096 = vdwg.mxu0
        %v1097 = vpack.c.bf16 %v978, %v978
        %v1098 = vpack.c.bf16 %v1035, %v1035
        %v1100 = vsel %vm815, %v1097, 0
        %v1103 = vsel %vm815, %v1098, 0
        %1105 = vmatprep.subr.bf16.mxu0 0
        %1106 = vmatpush1.bf16.xpose.msra.mxu0 %v1103
        %1107 = vmatprep.subr.bf16.mxu0 0
        %1108 = vmatpush1.bf16.xpose.msra.mxu0 0
        %1109 = vmatprep.subr.bf16.mxu0 0
        %1110 = vmatpush1.bf16.xpose.msra.mxu0 0
        %1111 = vmatprep.subr.bf16.mxu0 0
        %1112 = vmatpush1.bf16.xpose.msra.mxu0 0
        %1113 = vmatprep.subr.bf16.mxu0 0
        %1114 = vmatpush1.bf16.xpose.msra.mxu0 0
        %1115 = vmatprep.subr.bf16.mxu0 0
        %1116 = vmatpush1.bf16.xpose.msra.mxu0 0
        %1117 = vmatprep.subr.bf16.mxu0 0
        %1118 = vmatpush1.bf16.xpose.msra.mxu0 0
        %1119 = vmatprep.subr.bf16.mxu0 0
        %1120 = vmatpush1.bf16.xpose.msra.mxu0 0
        %1121 = vmatprep.subr.bf16.mxu0 0
        %1122 = vmatpush1.bf16.xpose.msra.mxu0 0
        %1123 = vmatprep.subr.bf16.mxu0 0
        %1124 = vmatpush1.bf16.xpose.msra.mxu0 0
        %1125 = vmatprep.subr.bf16.mxu0 0
        %1126 = vmatpush1.bf16.xpose.msra.mxu0 0
        %1127 = vmatprep.subr.bf16.mxu0 0
        %1128 = vmatpush1.bf16.xpose.msra.mxu0 0
        %1129 = vmatprep.subr.bf16.mxu0 0
        %1130 = vmatpush1.bf16.xpose.msra.mxu0 0
        %1131 = vmatprep.subr.bf16.mxu0 0
        %1132 = vmatpush1.bf16.xpose.msra.mxu0 0
        %1133 = vmatprep.subr.bf16.mxu0 0
        %1134 = vmatpush1.bf16.xpose.msra.mxu0 0
        %1135 = vmatprep.subr.bf16.mxu0 0
        %1136 = vmatpush1.bf16.xpose.msra.mxu0 0
        %1137 = vmatprep.mubr.bf16.mxu0 0
        %1138 = vmatmul.mubr.bf16.gmra.mrb[0].mxu0 %v1100
        %v1139 = vpop.f32.mrb[0].mxu0
        %v1140 = vadd.f32 0.0, %v1139
        %v1141 = vpop.f32.mrb[0].mxu0
        %v1142 = vpop.f32.mrb[0].mxu0
        %v1143 = vpop.f32.mrb[0].mxu0
        %1144 = vdwg.mxu0
        %v1145 = vsel %vm862, %v1140, -inf
        %1146 = vmax.xlane.f32.xlu0 %v1145
        %v1147 = vpop.xlane.xlu0 %1146
        %v1148 = vsub.f32 %v1140, %v1147
        %v1149 = vmul.f32 %v1148, 1.442695
        %v1150 = vpow.pop %v1149
        %v1151 = vsel %vm862, %v1150, 0.0
        %1152 = vadd.xlane.f32.xlu0 %v1151
        %v1153 = vpop.xlane.xlu0 %1152
        %v1154 = vrcp.pop %v1153
        %v1155 = vmul.f32 %v1150, %v1154
        %v1156 = vpack.c.bf16 %v1155, %v1155
        %v1157 = vpack.c.bf16 %v1092, %v1092
        %v1159 = vsel %vm862, %v1156, 0
        %v1162 = vsel %vm879, %v1157, 0
        %1164 = vmatprep.subr.bf16.mxu0 0
        %1165 = vmatpush1.bf16.msra.mxu0 %v1162
        %1166 = vmatprep.subr.bf16.mxu0 0
        %1167 = vmatpush1.bf16.msra.mxu0 0
        %1168 = vmatprep.subr.bf16.mxu0 0
        %1169 = vmatpush1.bf16.msra.mxu0 0
        %1170 = vmatprep.subr.bf16.mxu0 0
        %1171 = vmatpush1.bf16.msra.mxu0 0
        %1172 = vmatprep.subr.bf16.mxu0 0
        %1173 = vmatpush1.bf16.msra.mxu0 0
        %1174 = vmatprep.subr.bf16.mxu0 0
        %1175 = vmatpush1.bf16.msra.mxu0 0
        %1176 = vmatprep.subr.bf16.mxu0 0
        %1177 = vmatpush1.bf16.msra.mxu0 0
        %1178 = vmatprep.subr.bf16.mxu0 0
        %1179 = vmatpush1.bf16.msra.mxu0 0
        %1180 = vmatprep.subr.bf16.mxu0 0
        %1181 = vmatpush1.bf16.msra.mxu0 0
        %1182 = vmatprep.subr.bf16.mxu0 0
        %1183 = vmatpush1.bf16.msra.mxu0 0
        %1184 = vmatprep.subr.bf16.mxu0 0
        %1185 = vmatpush1.bf16.msra.mxu0 0
        %1186 = vmatprep.subr.bf16.mxu0 0
        %1187 = vmatpush1.bf16.msra.mxu0 0
        %1188 = vmatprep.subr.bf16.mxu0 0
        %1189 = vmatpush1.bf16.msra.mxu0 0
        %1190 = vmatprep.subr.bf16.mxu0 0
        %1191 = vmatpush1.bf16.msra.mxu0 0
        %1192 = vmatprep.subr.bf16.mxu0 0
        %1193 = vmatpush1.bf16.msra.mxu0 0
        %1194 = vmatprep.subr.bf16.mxu0 0
        %1195 = vmatpush1.bf16.msra.mxu0 0
        %1196 = vmatprep.mubr.bf16.mxu0 0
        %1197 = vmatmul.mubr.bf16.gmra.mrb[0].mxu0 %v1159
        %v1198 = vpop.f32.mrb[0].mxu0
        %v1199 = vadd.f32 0.0, %v1198
        %v1200 = vpop.f32.mrb[0].mxu0
        %v1201 = vpop.f32.mrb[0].mxu0
        %v1202 = vpop.f32.mrb[0].mxu0
        %1203 = vdwg.mxu0
        %v1204 = vpack.c.bf16 %v1199, %v1199
        %s1205 = scalar_lea.vmem %s573, 8
        %v1206 = vld [vmem:[%s1205] sm:$0xf]
        %v1207 = vld [vmem:[%s1205 + $0x4] sm:$0xf]
        %v1210 = vunpack.c.l.b16 %v1206
        %v1211 = vunpack.c.l.b16 %v1207
        %v1212 = vpack.c.b16 %v1211, %v1210
        %v1215 = vsel %vm815, %v1204, 0
        %1217 = vmatprep.subr.bf16.mxu0 0
        %1218 = vmatpush1.bf16.msra.mxu0 %v1212
        %1219 = vmatprep.subr.bf16.mxu0 0
        %1220 = vmatpush1.bf16.msra.mxu0 0
        %1221 = vmatprep.subr.bf16.mxu0 0
        %1222 = vmatpush1.bf16.msra.mxu0 0
        %1223 = vmatprep.subr.bf16.mxu0 0
        %1224 = vmatpush1.bf16.msra.mxu0 0
        %1225 = vmatprep.subr.bf16.mxu0 0
        %1226 = vmatpush1.bf16.msra.mxu0 0
        %1227 = vmatprep.subr.bf16.mxu0 0
        %1228 = vmatpush1.bf16.msra.mxu0 0
        %1229 = vmatprep.subr.bf16.mxu0 0
        %1230 = vmatpush1.bf16.msra.mxu0 0
        %1231 = vmatprep.subr.bf16.mxu0 0
        %1232 = vmatpush1.bf16.msra.mxu0 0
        %1233 = vmatprep.subr.bf16.mxu0 0
        %1234 = vmatpush1.bf16.msra.mxu0 0
        %1235 = vmatprep.subr.bf16.mxu0 0
        %1236 = vmatpush1.bf16.msra.mxu0 0
        %1237 = vmatprep.subr.bf16.mxu0 0
        %1238 = vmatpush1.bf16.msra.mxu0 0
        %1239 = vmatprep.subr.bf16.mxu0 0
        %1240 = vmatpush1.bf16.msra.mxu0 0
        %1241 = vmatprep.subr.bf16.mxu0 0
        %1242 = vmatpush1.bf16.msra.mxu0 0
        %1243 = vmatprep.subr.bf16.mxu0 0
        %1244 = vmatpush1.bf16.msra.mxu0 0
        %1245 = vmatprep.subr.bf16.mxu0 0
        %1246 = vmatpush1.bf16.msra.mxu0 0
        %1247 = vmatprep.subr.bf16.mxu0 0
        %1248 = vmatpush1.bf16.msra.mxu0 0
        %1249 = vmatprep.mubr.bf16.mxu0 0
        %1250 = vmatmul.mubr.bf16.gmra.mrb[0].mxu0 %v1215
        %v1251 = vpop.f32.mrb[0].mxu0
        %v1252 = vadd.f32 0.0, %v1251
        %v1253 = vpop.f32.mrb[0].mxu0
        %v1254 = vpop.f32.mrb[0].mxu0
        %v1255 = vpop.f32.mrb[0].mxu0
        %1256 = vdwg.mxu0
        %v1259 = vunpack.c.l.b16 %v924
        %v1260 = vunpack.c.l.b16 %v925
        %v1261 = vpack.c.b16 %v1260, %v1259
        %v1264 = vsel %vm815, %v923, 0
        %1266 = vmatprep.subr.bf16.mxu0 0
        %1267 = vmatpush1.bf16.msra.mxu0 %v1261
        %1268 = vmatprep.subr.bf16.mxu0 0
        %1269 = vmatpush1.bf16.msra.mxu0 0
        %1270 = vmatprep.subr.bf16.mxu0 0
        %1271 = vmatpush1.bf16.msra.mxu0 0
        %1272 = vmatprep.subr.bf16.mxu0 0
        %1273 = vmatpush1.bf16.msra.mxu0 0
        %1274 = vmatprep.subr.bf16.mxu0 0
        %1275 = vmatpush1.bf16.msra.mxu0 0
        %1276 = vmatprep.subr.bf16.mxu0 0
        %1277 = vmatpush1.bf16.msra.mxu0 0
        %1278 = vmatprep.subr.bf16.mxu0 0
        %1279 = vmatpush1.bf16.msra.mxu0 0
        %1280 = vmatprep.subr.bf16.mxu0 0
        %1281 = vmatpush1.bf16.msra.mxu0 0
        %1282 = vmatprep.subr.bf16.mxu0 0
        %1283 = vmatpush1.bf16.msra.mxu0 0
        %1284 = vmatprep.subr.bf16.mxu0 0
        %1285 = vmatpush1.bf16.msra.mxu0 0
        %1286 = vmatprep.subr.bf16.mxu0 0
        %1287 = vmatpush1.bf16.msra.mxu0 0
        %1288 = vmatprep.subr.bf16.mxu0 0
        %1289 = vmatpush1.bf16.msra.mxu0 0
        %1290 = vmatprep.subr.bf16.mxu0 0
        %1291 = vmatpush1.bf16.msra.mxu0 0
        %1292 = vmatprep.subr.bf16.mxu0 0
        %1293 = vmatpush1.bf16.msra.mxu0 0
        %1294 = vmatprep.subr.bf16.mxu0 0
        %1295 = vmatpush1.bf16.msra.mxu0 0
        %1296 = vmatprep.subr.bf16.mxu0 0
        %1297 = vmatpush1.bf16.msra.mxu0 0
        %1298 = vmatprep.mubr.bf16.mxu0 0
        %1299 = vmatmul.mubr.bf16.gmra.mrb[0].mxu0 %v1264
        %v1300 = vpop.f32.mrb[0].mxu0
        %v1301 = vadd.f32 %v1252, %v1300
        %v1302 = vpop.f32.mrb[0].mxu0
        %v1303 = vpop.f32.mrb[0].mxu0
        %v1304 = vpop.f32.mrb[0].mxu0
        %1305 = vdwg.mxu0
        %s1306 = scalar_lea.vmem %s568, 32
        %v1307 = vld [vmem:[%s1306] sm:$0xf]
        %v1308 = vld [vmem:[%s1306 + $0x4] sm:$0xf]
        %v1309 = vld [vmem:[%s1306 + $0x8] sm:$0xf]
        %v1310 = vld [vmem:[%s1306 + $0xc] sm:$0xf]
        %v1315 = vunpack.c.l.b16 %v1307
        %v1316 = vunpack.c.l.b16 %v1308
        %v1317 = vunpack.c.l.b16 %v1309
        %v1318 = vunpack.c.l.b16 %v1310
        %v1319 = vpack.c.b16 %v1316, %v1315
        %v1320 = vpack.c.b16 %v1318, %v1317
        %1323 = vmatprep.subr.bf16.mxu0 0
        %1324 = vmatpush1.bf16.msra.mxu0 %v1319
        %1325 = vmatprep.subr.bf16.mxu0 0
        %1326 = vmatpush1.bf16.msra.mxu0 %v1320
        %1327 = vmatprep.subr.bf16.mxu0 0
        %1328 = vmatpush1.bf16.msra.mxu0 0
        %1329 = vmatprep.subr.bf16.mxu0 0
        %1330 = vmatpush1.bf16.msra.mxu0 0
        %1331 = vmatprep.subr.bf16.mxu0 0
        %1332 = vmatpush1.bf16.msra.mxu0 0
        %1333 = vmatprep.subr.bf16.mxu0 0
        %1334 = vmatpush1.bf16.msra.mxu0 0
        %1335 = vmatprep.subr.bf16.mxu0 0
        %1336 = vmatpush1.bf16.msra.mxu0 0
        %1337 = vmatprep.subr.bf16.mxu0 0
        %1338 = vmatpush1.bf16.msra.mxu0 0
        %1339 = vmatprep.subr.bf16.mxu0 0
        %1340 = vmatpush1.bf16.msra.mxu0 0
        %1341 = vmatprep.subr.bf16.mxu0 0
        %1342 = vmatpush1.bf16.msra.mxu0 0
        %1343 = vmatprep.subr.bf16.mxu0 0
        %1344 = vmatpush1.bf16.msra.mxu0 0
        %1345 = vmatprep.subr.bf16.mxu0 0
        %1346 = vmatpush1.bf16.msra.mxu0 0
        %1347 = vmatprep.subr.bf16.mxu0 0
        %1348 = vmatpush1.bf16.msra.mxu0 0
        %1349 = vmatprep.subr.bf16.mxu0 0
        %1350 = vmatpush1.bf16.msra.mxu0 0
        %1351 = vmatprep.subr.bf16.mxu0 0
        %1352 = vmatpush1.bf16.msra.mxu0 0
        %1353 = vmatprep.subr.bf16.mxu0 0
        %1354 = vmatpush1.bf16.msra.mxu0 0
        %1355 = vmatprep.mubr.bf16.mxu0 0
        %1356 = vmatmul.mubr.bf16.gmra.mrb[0].mxu0 %v657
        %v1357 = vpop.f32.mrb[0].mxu0
        %v1358 = vadd.f32 0.0, %v1357
        %v1359 = vpop.f32.mrb[0].mxu0
        %v1360 = vpop.f32.mrb[0].mxu0
        %v1361 = vpop.f32.mrb[0].mxu0
        %1362 = vdwg.mxu0
        %s1363 = scalar_lea.vmem %s568, 96
        %v1364 = vld [vmem:[%s1363] sm:$0xf]
        %v1365 = vld [vmem:[%s1363 + $0x4] sm:$0xf]
        %v1366 = vld [vmem:[%s1363 + $0x8] sm:$0xf]
        %v1367 = vld [vmem:[%s1363 + $0xc] sm:$0xf]
        %v1372 = vunpack.c.l.b16 %v1364
        %v1373 = vunpack.c.l.b16 %v1365
        %v1374 = vunpack.c.l.b16 %v1366
        %v1375 = vunpack.c.l.b16 %v1367
        %v1376 = vpack.c.b16 %v1373, %v1372
        %v1377 = vpack.c.b16 %v1375, %v1374
        %1380 = vmatprep.subr.bf16.mxu0 0
        %1381 = vmatpush1.bf16.msra.mxu0 %v1376
        %1382 = vmatprep.subr.bf16.mxu0 0
        %1383 = vmatpush1.bf16.msra.mxu0 %v1377
        %1384 = vmatprep.subr.bf16.mxu0 0
        %1385 = vmatpush1.bf16.msra.mxu0 0
        %1386 = vmatprep.subr.bf16.mxu0 0
        %1387 = vmatpush1.bf16.msra.mxu0 0
        %1388 = vmatprep.subr.bf16.mxu0 0
        %1389 = vmatpush1.bf16.msra.mxu0 0
        %1390 = vmatprep.subr.bf16.mxu0 0
        %1391 = vmatpush1.bf16.msra.mxu0 0
        %1392 = vmatprep.subr.bf16.mxu0 0
        %1393 = vmatpush1.bf16.msra.mxu0 0
        %1394 = vmatprep.subr.bf16.mxu0 0
        %1395 = vmatpush1.bf16.msra.mxu0 0
        %1396 = vmatprep.subr.bf16.mxu0 0
        %1397 = vmatpush1.bf16.msra.mxu0 0
        %1398 = vmatprep.subr.bf16.mxu0 0
        %1399 = vmatpush1.bf16.msra.mxu0 0
        %1400 = vmatprep.subr.bf16.mxu0 0
        %1401 = vmatpush1.bf16.msra.mxu0 0
        %1402 = vmatprep.subr.bf16.mxu0 0
        %1403 = vmatpush1.bf16.msra.mxu0 0
        %1404 = vmatprep.subr.bf16.mxu0 0
        %1405 = vmatpush1.bf16.msra.mxu0 0
        %1406 = vmatprep.subr.bf16.mxu0 0
        %1407 = vmatpush1.bf16.msra.mxu0 0
        %1408 = vmatprep.subr.bf16.mxu0 0
        %1409 = vmatpush1.bf16.msra.mxu0 0
        %1410 = vmatprep.subr.bf16.mxu0 0
        %1411 = vmatpush1.bf16.msra.mxu0 0
        %1412 = vmatprep.mubr.bf16.mxu0 0
        %1413 = vmatmul.mubr.bf16.gmra.mrb[0].mxu0 %v657
        %v1414 = vpop.f32.mrb[0].mxu0
        %v1415 = vadd.f32 0.0, %v1414
        %v1416 = vpop.f32.mrb[0].mxu0
        %v1417 = vpop.f32.mrb[0].mxu0
        %v1418 = vpop.f32.mrb[0].mxu0
        %1419 = vdwg.mxu0
        %s1420 = scalar_lea.vmem %s568, 160
        %v1421 = vld [vmem:[%s1420] sm:$0xf]
        %v1422 = vld [vmem:[%s1420 + $0x4] sm:$0xf]
        %v1423 = vld [vmem:[%s1420 + $0x8] sm:$0xf]
        %v1424 = vld [vmem:[%s1420 + $0xc] sm:$0xf]
        %v1429 = vunpack.c.l.b16 %v1421
        %v1430 = vunpack.c.l.b16 %v1422
        %v1431 = vunpack.c.l.b16 %v1423
        %v1432 = vunpack.c.l.b16 %v1424
        %v1433 = vpack.c.b16 %v1430, %v1429
        %v1434 = vpack.c.b16 %v1432, %v1431
        %1437 = vmatprep.subr.bf16.mxu0 0
        %1438 = vmatpush1.bf16.msra.mxu0 %v1433
        %1439 = vmatprep.subr.bf16.mxu0 0
        %1440 = vmatpush1.bf16.msra.mxu0 %v1434
        %1441 = vmatprep.subr.bf16.mxu0 0
        %1442 = vmatpush1.bf16.msra.mxu0 0
        %1443 = vmatprep.subr.bf16.mxu0 0
        %1444 = vmatpush1.bf16.msra.mxu0 0
        %1445 = vmatprep.subr.bf16.mxu0 0
        %1446 = vmatpush1.bf16.msra.mxu0 0
        %1447 = vmatprep.subr.bf16.mxu0 0
        %1448 = vmatpush1.bf16.msra.mxu0 0
        %1449 = vmatprep.subr.bf16.mxu0 0
        %1450 = vmatpush1.bf16.msra.mxu0 0
        %1451 = vmatprep.subr.bf16.mxu0 0
        %1452 = vmatpush1.bf16.msra.mxu0 0
        %1453 = vmatprep.subr.bf16.mxu0 0
        %1454 = vmatpush1.bf16.msra.mxu0 0
        %1455 = vmatprep.subr.bf16.mxu0 0
        %1456 = vmatpush1.bf16.msra.mxu0 0
        %1457 = vmatprep.subr.bf16.mxu0 0
        %1458 = vmatpush1.bf16.msra.mxu0 0
        %1459 = vmatprep.subr.bf16.mxu0 0
        %1460 = vmatpush1.bf16.msra.mxu0 0
        %1461 = vmatprep.subr.bf16.mxu0 0
        %1462 = vmatpush1.bf16.msra.mxu0 0
        %1463 = vmatprep.subr.bf16.mxu0 0
        %1464 = vmatpush1.bf16.msra.mxu0 0
        %1465 = vmatprep.subr.bf16.mxu0 0
        %1466 = vmatpush1.bf16.msra.mxu0 0
        %1467 = vmatprep.subr.bf16.mxu0 0
        %1468 = vmatpush1.bf16.msra.mxu0 0
        %1469 = vmatprep.mubr.bf16.mxu0 0
        %1470 = vmatmul.mubr.bf16.gmra.mrb[0].mxu0 %v657
        %v1471 = vpop.f32.mrb[0].mxu0
        %v1472 = vadd.f32 0.0, %v1471
        %v1473 = vpop.f32.mrb[0].mxu0
        %v1474 = vpop.f32.mrb[0].mxu0
        %v1475 = vpop.f32.mrb[0].mxu0
        %1476 = vdwg.mxu0
        %v1477 = vpack.c.bf16 %v1358, %v1358
        %v1478 = vpack.c.bf16 %v1415, %v1415
        %v1480 = vsel %vm815, %v1477, 0
        %v1483 = vsel %vm815, %v1478, 0
        %1485 = vmatprep.subr.bf16.mxu0 0
        %1486 = vmatpush1.bf16.xpose.msra.mxu0 %v1483
        %1487 = vmatprep.subr.bf16.mxu0 0
        %1488 = vmatpush1.bf16.xpose.msra.mxu0 0
        %1489 = vmatprep.subr.bf16.mxu0 0
        %1490 = vmatpush1.bf16.xpose.msra.mxu0 0
        %1491 = vmatprep.subr.bf16.mxu0 0
        %1492 = vmatpush1.bf16.xpose.msra.mxu0 0
        %1493 = vmatprep.subr.bf16.mxu0 0
        %1494 = vmatpush1.bf16.xpose.msra.mxu0 0
        %1495 = vmatprep.subr.bf16.mxu0 0
        %1496 = vmatpush1.bf16.xpose.msra.mxu0 0
        %1497 = vmatprep.subr.bf16.mxu0 0
        %1498 = vmatpush1.bf16.xpose.msra.mxu0 0
        %1499 = vmatprep.subr.bf16.mxu0 0
        %1500 = vmatpush1.bf16.xpose.msra.mxu0 0
        %1501 = vmatprep.subr.bf16.mxu0 0
        %1502 = vmatpush1.bf16.xpose.msra.mxu0 0
        %1503 = vmatprep.subr.bf16.mxu0 0
        %1504 = vmatpush1.bf16.xpose.msra.mxu0 0
        %1505 = vmatprep.subr.bf16.mxu0 0
        %1506 = vmatpush1.bf16.xpose.msra.mxu0 0
        %1507 = vmatprep.subr.bf16.mxu0 0
        %1508 = vmatpush1.bf16.xpose.msra.mxu0 0
        %1509 = vmatprep.subr.bf16.mxu0 0
        %1510 = vmatpush1.bf16.xpose.msra.mxu0 0
        %1511 = vmatprep.subr.bf16.mxu0 0
        %1512 = vmatpush1.bf16.xpose.msra.mxu0 0
        %1513 = vmatprep.subr.bf16.mxu0 0
        %1514 = vmatpush1.bf16.xpose.msra.mxu0 0
        %1515 = vmatprep.subr.bf16.mxu0 0
        %1516 = vmatpush1.bf16.xpose.msra.mxu0 0
        %1517 = vmatprep.mubr.bf16.mxu0 0
        %1518 = vmatmul.mubr.bf16.gmra.mrb[0].mxu0 %v1480
        %v1519 = vpop.f32.mrb[0].mxu0
        %v1520 = vadd.f32 0.0, %v1519
        %v1521 = vpop.f32.mrb[0].mxu0
        %v1522 = vpop.f32.mrb[0].mxu0
        %v1523 = vpop.f32.mrb[0].mxu0
        %1524 = vdwg.mxu0
        %v1525 = vsel %vm862, %v1520, -inf
        %1526 = vmax.xlane.f32.xlu0 %v1525
        %v1527 = vpop.xlane.xlu0 %1526
        %v1528 = vsub.f32 %v1520, %v1527
        %v1529 = vmul.f32 %v1528, 1.442695
        %v1530 = vpow.pop %v1529
        %v1531 = vsel %vm862, %v1530, 0.0
        %1532 = vadd.xlane.f32.xlu0 %v1531
        %v1533 = vpop.xlane.xlu0 %1532
        %v1534 = vrcp.pop %v1533
        %v1535 = vmul.f32 %v1530, %v1534
        %v1536 = vpack.c.bf16 %v1535, %v1535
        %v1537 = vpack.c.bf16 %v1472, %v1472
        %v1539 = vsel %vm862, %v1536, 0
        %v1542 = vsel %vm879, %v1537, 0
        %1544 = vmatprep.subr.bf16.mxu0 0
        %1545 = vmatpush1.bf16.msra.mxu0 %v1542
        %1546 = vmatprep.subr.bf16.mxu0 0
        %1547 = vmatpush1.bf16.msra.mxu0 0
        %1548 = vmatprep.subr.bf16.mxu0 0
        %1549 = vmatpush1.bf16.msra.mxu0 0
        %1550 = vmatprep.subr.bf16.mxu0 0
        %1551 = vmatpush1.bf16.msra.mxu0 0
        %1552 = vmatprep.subr.bf16.mxu0 0
        %1553 = vmatpush1.bf16.msra.mxu0 0
        %1554 = vmatprep.subr.bf16.mxu0 0
        %1555 = vmatpush1.bf16.msra.mxu0 0
        %1556 = vmatprep.subr.bf16.mxu0 0
        %1557 = vmatpush1.bf16.msra.mxu0 0
        %1558 = vmatprep.subr.bf16.mxu0 0
        %1559 = vmatpush1.bf16.msra.mxu0 0
        %1560 = vmatprep.subr.bf16.mxu0 0
        %1561 = vmatpush1.bf16.msra.mxu0 0
        %1562 = vmatprep.subr.bf16.mxu0 0
        %1563 = vmatpush1.bf16.msra.mxu0 0
        %1564 = vmatprep.subr.bf16.mxu0 0
        %1565 = vmatpush1.bf16.msra.mxu0 0
        %1566 = vmatprep.subr.bf16.mxu0 0
        %1567 = vmatpush1.bf16.msra.mxu0 0
        %1568 = vmatprep.subr.bf16.mxu0 0
        %1569 = vmatpush1.bf16.msra.mxu0 0
        %1570 = vmatprep.subr.bf16.mxu0 0
        %1571 = vmatpush1.bf16.msra.mxu0 0
        %1572 = vmatprep.subr.bf16.mxu0 0
        %1573 = vmatpush1.bf16.msra.mxu0 0
        %1574 = vmatprep.subr.bf16.mxu0 0
        %1575 = vmatpush1.bf16.msra.mxu0 0
        %1576 = vmatprep.mubr.bf16.mxu0 0
        %1577 = vmatmul.mubr.bf16.gmra.mrb[0].mxu0 %v1539
        %v1578 = vpop.f32.mrb[0].mxu0
        %v1579 = vadd.f32 0.0, %v1578
        %v1580 = vpop.f32.mrb[0].mxu0
        %v1581 = vpop.f32.mrb[0].mxu0
        %v1582 = vpop.f32.mrb[0].mxu0
        %1583 = vdwg.mxu0
        %v1584 = vpack.c.bf16 %v1579, %v1579
        %s1585 = scalar_lea.vmem %s573, 16
        %v1586 = vld [vmem:[%s1585] sm:$0xf]
        %v1587 = vld [vmem:[%s1585 + $0x4] sm:$0xf]
        %v1590 = vunpack.c.l.b16 %v1586
        %v1591 = vunpack.c.l.b16 %v1587
        %v1592 = vpack.c.b16 %v1591, %v1590
        %v1595 = vsel %vm815, %v1584, 0
        %1597 = vmatprep.subr.bf16.mxu0 0
        %1598 = vmatpush1.bf16.msra.mxu0 %v1592
        %1599 = vmatprep.subr.bf16.mxu0 0
        %1600 = vmatpush1.bf16.msra.mxu0 0
        %1601 = vmatprep.subr.bf16.mxu0 0
        %1602 = vmatpush1.bf16.msra.mxu0 0
        %1603 = vmatprep.subr.bf16.mxu0 0
        %1604 = vmatpush1.bf16.msra.mxu0 0
        %1605 = vmatprep.subr.bf16.mxu0 0
        %1606 = vmatpush1.bf16.msra.mxu0 0
        %1607 = vmatprep.subr.bf16.mxu0 0
        %1608 = vmatpush1.bf16.msra.mxu0 0
        %1609 = vmatprep.subr.bf16.mxu0 0
        %1610 = vmatpush1.bf16.msra.mxu0 0
        %1611 = vmatprep.subr.bf16.mxu0 0
        %1612 = vmatpush1.bf16.msra.mxu0 0
        %1613 = vmatprep.subr.bf16.mxu0 0
        %1614 = vmatpush1.bf16.msra.mxu0 0
        %1615 = vmatprep.subr.bf16.mxu0 0
        %1616 = vmatpush1.bf16.msra.mxu0 0
        %1617 = vmatprep.subr.bf16.mxu0 0
        %1618 = vmatpush1.bf16.msra.mxu0 0
        %1619 = vmatprep.subr.bf16.mxu0 0
        %1620 = vmatpush1.bf16.msra.mxu0 0
        %1621 = vmatprep.subr.bf16.mxu0 0
        %1622 = vmatpush1.bf16.msra.mxu0 0
        %1623 = vmatprep.subr.bf16.mxu0 0
        %1624 = vmatpush1.bf16.msra.mxu0 0
        %1625 = vmatprep.subr.bf16.mxu0 0
        %1626 = vmatpush1.bf16.msra.mxu0 0
        %1627 = vmatprep.subr.bf16.mxu0 0
        %1628 = vmatpush1.bf16.msra.mxu0 0
        %1629 = vmatprep.mubr.bf16.mxu0 0
        %1630 = vmatmul.mubr.bf16.gmra.mrb[0].mxu0 %v1595
        %v1631 = vpop.f32.mrb[0].mxu0
        %v1632 = vadd.f32 0.0, %v1631
        %v1633 = vpop.f32.mrb[0].mxu0
        %v1634 = vpop.f32.mrb[0].mxu0
        %v1635 = vpop.f32.mrb[0].mxu0
        %1636 = vdwg.mxu0
        %v1637 = vadd.f32 %v1301, %v1632
        %s1638 = scalar_lea.vmem %s568, 48
        %v1639 = vld [vmem:[%s1638] sm:$0xf]
        %v1640 = vld [vmem:[%s1638 + $0x4] sm:$0xf]
        %v1641 = vld [vmem:[%s1638 + $0x8] sm:$0xf]
        %v1642 = vld [vmem:[%s1638 + $0xc] sm:$0xf]
        %v1647 = vunpack.c.l.b16 %v1639
        %v1648 = vunpack.c.l.b16 %v1640
        %v1649 = vunpack.c.l.b16 %v1641
        %v1650 = vunpack.c.l.b16 %v1642
        %v1651 = vpack.c.b16 %v1648, %v1647
        %v1652 = vpack.c.b16 %v1650, %v1649
        %1655 = vmatprep.subr.bf16.mxu0 0
        %1656 = vmatpush1.bf16.msra.mxu0 %v1651
        %1657 = vmatprep.subr.bf16.mxu0 0
        %1658 = vmatpush1.bf16.msra.mxu0 %v1652
        %1659 = vmatprep.subr.bf16.mxu0 0
        %1660 = vmatpush1.bf16.msra.mxu0 0
        %1661 = vmatprep.subr.bf16.mxu0 0
        %1662 = vmatpush1.bf16.msra.mxu0 0
        %1663 = vmatprep.subr.bf16.mxu0 0
        %1664 = vmatpush1.bf16.msra.mxu0 0
        %1665 = vmatprep.subr.bf16.mxu0 0
        %1666 = vmatpush1.bf16.msra.mxu0 0
        %1667 = vmatprep.subr.bf16.mxu0 0
        %1668 = vmatpush1.bf16.msra.mxu0 0
        %1669 = vmatprep.subr.bf16.mxu0 0
        %1670 = vmatpush1.bf16.msra.mxu0 0
        %1671 = vmatprep.subr.bf16.mxu0 0
        %1672 = vmatpush1.bf16.msra.mxu0 0
        %1673 = vmatprep.subr.bf16.mxu0 0
        %1674 = vmatpush1.bf16.msra.mxu0 0
        %1675 = vmatprep.subr.bf16.mxu0 0
        %1676 = vmatpush1.bf16.msra.mxu0 0
        %1677 = vmatprep.subr.bf16.mxu0 0
        %1678 = vmatpush1.bf16.msra.mxu0 0
        %1679 = vmatprep.subr.bf16.mxu0 0
        %1680 = vmatpush1.bf16.msra.mxu0 0
        %1681 = vmatprep.subr.bf16.mxu0 0
        %1682 = vmatpush1.bf16.msra.mxu0 0
        %1683 = vmatprep.subr.bf16.mxu0 0
        %1684 = vmatpush1.bf16.msra.mxu0 0
        %1685 = vmatprep.subr.bf16.mxu0 0
        %1686 = vmatpush1.bf16.msra.mxu0 0
        %1687 = vmatprep.mubr.bf16.mxu0 0
        %1688 = vmatmul.mubr.bf16.gmra.mrb[0].mxu0 %v657
        %v1689 = vpop.f32.mrb[0].mxu0
        %v1690 = vadd.f32 0.0, %v1689
        %v1691 = vpop.f32.mrb[0].mxu0
        %v1692 = vpop.f32.mrb[0].mxu0
        %v1693 = vpop.f32.mrb[0].mxu0
        %1694 = vdwg.mxu0
        %s1695 = scalar_lea.vmem %s568, 112
        %v1696 = vld [vmem:[%s1695] sm:$0xf]
        %v1697 = vld [vmem:[%s1695 + $0x4] sm:$0xf]
        %v1698 = vld [vmem:[%s1695 + $0x8] sm:$0xf]
        %v1699 = vld [vmem:[%s1695 + $0xc] sm:$0xf]
        %v1704 = vunpack.c.l.b16 %v1696
        %v1705 = vunpack.c.l.b16 %v1697
        %v1706 = vunpack.c.l.b16 %v1698
        %v1707 = vunpack.c.l.b16 %v1699
        %v1708 = vpack.c.b16 %v1705, %v1704
        %v1709 = vpack.c.b16 %v1707, %v1706
        %1712 = vmatprep.subr.bf16.mxu0 0
        %1713 = vmatpush1.bf16.msra.mxu0 %v1708
        %1714 = vmatprep.subr.bf16.mxu0 0
        %1715 = vmatpush1.bf16.msra.mxu0 %v1709
        %1716 = vmatprep.subr.bf16.mxu0 0
        %1717 = vmatpush1.bf16.msra.mxu0 0
        %1718 = vmatprep.subr.bf16.mxu0 0
        %1719 = vmatpush1.bf16.msra.mxu0 0
        %1720 = vmatprep.subr.bf16.mxu0 0
        %1721 = vmatpush1.bf16.msra.mxu0 0
        %1722 = vmatprep.subr.bf16.mxu0 0
        %1723 = vmatpush1.bf16.msra.mxu0 0
        %1724 = vmatprep.subr.bf16.mxu0 0
        %1725 = vmatpush1.bf16.msra.mxu0 0
        %1726 = vmatprep.subr.bf16.mxu0 0
        %1727 = vmatpush1.bf16.msra.mxu0 0
        %1728 = vmatprep.subr.bf16.mxu0 0
        %1729 = vmatpush1.bf16.msra.mxu0 0
        %1730 = vmatprep.subr.bf16.mxu0 0
        %1731 = vmatpush1.bf16.msra.mxu0 0
        %1732 = vmatprep.subr.bf16.mxu0 0
        %1733 = vmatpush1.bf16.msra.mxu0 0
        %1734 = vmatprep.subr.bf16.mxu0 0
        %1735 = vmatpush1.bf16.msra.mxu0 0
        %1736 = vmatprep.subr.bf16.mxu0 0
        %1737 = vmatpush1.bf16.msra.mxu0 0
        %1738 = vmatprep.subr.bf16.mxu0 0
        %1739 = vmatpush1.bf16.msra.mxu0 0
        %1740 = vmatprep.subr.bf16.mxu0 0
        %1741 = vmatpush1.bf16.msra.mxu0 0
        %1742 = vmatprep.subr.bf16.mxu0 0
        %1743 = vmatpush1.bf16.msra.mxu0 0
        %1744 = vmatprep.mubr.bf16.mxu0 0
        %1745 = vmatmul.mubr.bf16.gmra.mrb[0].mxu0 %v657
        %v1746 = vpop.f32.mrb[0].mxu0
        %v1747 = vadd.f32 0.0, %v1746
        %v1748 = vpop.f32.mrb[0].mxu0
        %v1749 = vpop.f32.mrb[0].mxu0
        %v1750 = vpop.f32.mrb[0].mxu0
        %1751 = vdwg.mxu0
        %s1752 = scalar_lea.vmem %s568, 176
        %v1753 = vld [vmem:[%s1752] sm:$0xf]
        %v1754 = vld [vmem:[%s1752 + $0x4] sm:$0xf]
        %v1755 = vld [vmem:[%s1752 + $0x8] sm:$0xf]
        %v1756 = vld [vmem:[%s1752 + $0xc] sm:$0xf]
        %v1761 = vunpack.c.l.b16 %v1753
        %v1762 = vunpack.c.l.b16 %v1754
        %v1763 = vunpack.c.l.b16 %v1755
        %v1764 = vunpack.c.l.b16 %v1756
        %v1765 = vpack.c.b16 %v1762, %v1761
        %v1766 = vpack.c.b16 %v1764, %v1763
        %1769 = vmatprep.subr.bf16.mxu0 0
        %1770 = vmatpush1.bf16.msra.mxu0 %v1765
        %1771 = vmatprep.subr.bf16.mxu0 0
        %1772 = vmatpush1.bf16.msra.mxu0 %v1766
        %1773 = vmatprep.subr.bf16.mxu0 0
        %1774 = vmatpush1.bf16.msra.mxu0 0
        %1775 = vmatprep.subr.bf16.mxu0 0
        %1776 = vmatpush1.bf16.msra.mxu0 0
        %1777 = vmatprep.subr.bf16.mxu0 0
        %1778 = vmatpush1.bf16.msra.mxu0 0
        %1779 = vmatprep.subr.bf16.mxu0 0
        %1780 = vmatpush1.bf16.msra.mxu0 0
        %1781 = vmatprep.subr.bf16.mxu0 0
        %1782 = vmatpush1.bf16.msra.mxu0 0
        %1783 = vmatprep.subr.bf16.mxu0 0
        %1784 = vmatpush1.bf16.msra.mxu0 0
        %1785 = vmatprep.subr.bf16.mxu0 0
        %1786 = vmatpush1.bf16.msra.mxu0 0
        %1787 = vmatprep.subr.bf16.mxu0 0
        %1788 = vmatpush1.bf16.msra.mxu0 0
        %1789 = vmatprep.subr.bf16.mxu0 0
        %1790 = vmatpush1.bf16.msra.mxu0 0
        %1791 = vmatprep.subr.bf16.mxu0 0
        %1792 = vmatpush1.bf16.msra.mxu0 0
        %1793 = vmatprep.subr.bf16.mxu0 0
        %1794 = vmatpush1.bf16.msra.mxu0 0
        %1795 = vmatprep.subr.bf16.mxu0 0
        %1796 = vmatpush1.bf16.msra.mxu0 0
        %1797 = vmatprep.subr.bf16.mxu0 0
        %1798 = vmatpush1.bf16.msra.mxu0 0
        %1799 = vmatprep.subr.bf16.mxu0 0
        %1800 = vmatpush1.bf16.msra.mxu0 0
        %1801 = vmatprep.mubr.bf16.mxu0 0
        %1802 = vmatmul.mubr.bf16.gmra.mrb[0].mxu0 %v657
        %v1803 = vpop.f32.mrb[0].mxu0
        %v1804 = vadd.f32 0.0, %v1803
        %v1805 = vpop.f32.mrb[0].mxu0
        %v1806 = vpop.f32.mrb[0].mxu0
        %v1807 = vpop.f32.mrb[0].mxu0
        %1808 = vdwg.mxu0
        %v1809 = vpack.c.bf16 %v1690, %v1690
        %v1810 = vpack.c.bf16 %v1747, %v1747
        %v1812 = vsel %vm815, %v1809, 0
        %v1815 = vsel %vm815, %v1810, 0
        %1817 = vmatprep.subr.bf16.mxu0 0
        %1818 = vmatpush1.bf16.xpose.msra.mxu0 %v1815
        %1819 = vmatprep.subr.bf16.mxu0 0
        %1820 = vmatpush1.bf16.xpose.msra.mxu0 0
        %1821 = vmatprep.subr.bf16.mxu0 0
        %1822 = vmatpush1.bf16.xpose.msra.mxu0 0
        %1823 = vmatprep.subr.bf16.mxu0 0
        %1824 = vmatpush1.bf16.xpose.msra.mxu0 0
        %1825 = vmatprep.subr.bf16.mxu0 0
        %1826 = vmatpush1.bf16.xpose.msra.mxu0 0
        %1827 = vmatprep.subr.bf16.mxu0 0
        %1828 = vmatpush1.bf16.xpose.msra.mxu0 0
        %1829 = vmatprep.subr.bf16.mxu0 0
        %1830 = vmatpush1.bf16.xpose.msra.mxu0 0
        %1831 = vmatprep.subr.bf16.mxu0 0
        %1832 = vmatpush1.bf16.xpose.msra.mxu0 0
        %1833 = vmatprep.subr.bf16.mxu0 0
        %1834 = vmatpush1.bf16.xpose.msra.mxu0 0
        %1835 = vmatprep.subr.bf16.mxu0 0
        %1836 = vmatpush1.bf16.xpose.msra.mxu0 0
        %1837 = vmatprep.subr.bf16.mxu0 0
        %1838 = vmatpush1.bf16.xpose.msra.mxu0 0
        %1839 = vmatprep.subr.bf16.mxu0 0
        %1840 = vmatpush1.bf16.xpose.msra.mxu0 0
        %1841 = vmatprep.subr.bf16.mxu0 0
        %1842 = vmatpush1.bf16.xpose.msra.mxu0 0
        %1843 = vmatprep.subr.bf16.mxu0 0
        %1844 = vmatpush1.bf16.xpose.msra.mxu0 0
        %1845 = vmatprep.subr.bf16.mxu0 0
        %1846 = vmatpush1.bf16.xpose.msra.mxu0 0
        %1847 = vmatprep.subr.bf16.mxu0 0
        %1848 = vmatpush1.bf16.xpose.msra.mxu0 0
        %1849 = vmatprep.mubr.bf16.mxu0 0
        %1850 = vmatmul.mubr.bf16.gmra.mrb[0].mxu0 %v1812
        %v1851 = vpop.f32.mrb[0].mxu0
        %v1852 = vadd.f32 0.0, %v1851
        %v1853 = vpop.f32.mrb[0].mxu0
        %v1854 = vpop.f32.mrb[0].mxu0
        %v1855 = vpop.f32.mrb[0].mxu0
        %1856 = vdwg.mxu0
        %v1857 = vsel %vm862, %v1852, -inf
        %1858 = vmax.xlane.f32.xlu0 %v1857
        %v1859 = vpop.xlane.xlu0 %1858
        %v1860 = vsub.f32 %v1852, %v1859
        %v1861 = vmul.f32 %v1860, 1.442695
        %v1862 = vpow.pop %v1861
        %v1863 = vsel %vm862, %v1862, 0.0
        %1864 = vadd.xlane.f32.xlu0 %v1863
        %v1865 = vpop.xlane.xlu0 %1864
        %v1866 = vrcp.pop %v1865
        %v1867 = vmul.f32 %v1862, %v1866
        %v1868 = vpack.c.bf16 %v1867, %v1867
        %v1869 = vpack.c.bf16 %v1804, %v1804
        %v1871 = vsel %vm862, %v1868, 0
        %v1874 = vsel %vm879, %v1869, 0
        %1876 = vmatprep.subr.bf16.mxu0 0
        %1877 = vmatpush1.bf16.msra.mxu0 %v1874
        %1878 = vmatprep.subr.bf16.mxu0 0
        %1879 = vmatpush1.bf16.msra.mxu0 0
        %1880 = vmatprep.subr.bf16.mxu0 0
        %1881 = vmatpush1.bf16.msra.mxu0 0
        %1882 = vmatprep.subr.bf16.mxu0 0
        %1883 = vmatpush1.bf16.msra.mxu0 0
        %1884 = vmatprep.subr.bf16.mxu0 0
        %1885 = vmatpush1.bf16.msra.mxu0 0
        %1886 = vmatprep.subr.bf16.mxu0 0
        %1887 = vmatpush1.bf16.msra.mxu0 0
        %1888 = vmatprep.subr.bf16.mxu0 0
        %1889 = vmatpush1.bf16.msra.mxu0 0
        %1890 = vmatprep.subr.bf16.mxu0 0
        %1891 = vmatpush1.bf16.msra.mxu0 0
        %1892 = vmatprep.subr.bf16.mxu0 0
        %1893 = vmatpush1.bf16.msra.mxu0 0
        %1894 = vmatprep.subr.bf16.mxu0 0
        %1895 = vmatpush1.bf16.msra.mxu0 0
        %1896 = vmatprep.subr.bf16.mxu0 0
        %1897 = vmatpush1.bf16.msra.mxu0 0
        %1898 = vmatprep.subr.bf16.mxu0 0
        %1899 = vmatpush1.bf16.msra.mxu0 0
        %1900 = vmatprep.subr.bf16.mxu0 0
        %1901 = vmatpush1.bf16.msra.mxu0 0
        %1902 = vmatprep.subr.bf16.mxu0 0
        %1903 = vmatpush1.bf16.msra.mxu0 0
        %1904 = vmatprep.subr.bf16.mxu0 0
        %1905 = vmatpush1.bf16.msra.mxu0 0
        %1906 = vmatprep.subr.bf16.mxu0 0
        %1907 = vmatpush1.bf16.msra.mxu0 0
        %1908 = vmatprep.mubr.bf16.mxu0 0
        %1909 = vmatmul.mubr.bf16.gmra.mrb[0].mxu0 %v1871
        %v1910 = vpop.f32.mrb[0].mxu0
        %v1911 = vadd.f32 0.0, %v1910
        %v1912 = vpop.f32.mrb[0].mxu0
        %v1913 = vpop.f32.mrb[0].mxu0
        %v1914 = vpop.f32.mrb[0].mxu0
        %1915 = vdwg.mxu0
        %v1916 = vpack.c.bf16 %v1911, %v1911
        %s1917 = scalar_lea.vmem %s573, 24
        %v1918 = vld [vmem:[%s1917] sm:$0xf]
        %v1919 = vld [vmem:[%s1917 + $0x4] sm:$0xf]
        %v1922 = vunpack.c.l.b16 %v1918
        %v1923 = vunpack.c.l.b16 %v1919
        %v1924 = vpack.c.b16 %v1923, %v1922
        %v1927 = vsel %vm815, %v1916, 0
        %1929 = vmatprep.subr.bf16.mxu0 0
        %1930 = vmatpush1.bf16.msra.mxu0 %v1924
        %1931 = vmatprep.subr.bf16.mxu0 0
        %1932 = vmatpush1.bf16.msra.mxu0 0
        %1933 = vmatprep.subr.bf16.mxu0 0
        %1934 = vmatpush1.bf16.msra.mxu0 0
        %1935 = vmatprep.subr.bf16.mxu0 0
        %1936 = vmatpush1.bf16.msra.mxu0 0
        %1937 = vmatprep.subr.bf16.mxu0 0
        %1938 = vmatpush1.bf16.msra.mxu0 0
        %1939 = vmatprep.subr.bf16.mxu0 0
        %1940 = vmatpush1.bf16.msra.mxu0 0
        %1941 = vmatprep.subr.bf16.mxu0 0
        %1942 = vmatpush1.bf16.msra.mxu0 0
        %1943 = vmatprep.subr.bf16.mxu0 0
        %1944 = vmatpush1.bf16.msra.mxu0 0
        %1945 = vmatprep.subr.bf16.mxu0 0
        %1946 = vmatpush1.bf16.msra.mxu0 0
        %1947 = vmatprep.subr.bf16.mxu0 0
        %1948 = vmatpush1.bf16.msra.mxu0 0
        %1949 = vmatprep.subr.bf16.mxu0 0
        %1950 = vmatpush1.bf16.msra.mxu0 0
        %1951 = vmatprep.subr.bf16.mxu0 0
        %1952 = vmatpush1.bf16.msra.mxu0 0
        %1953 = vmatprep.subr.bf16.mxu0 0
        %1954 = vmatpush1.bf16.msra.mxu0 0
        %1955 = vmatprep.subr.bf16.mxu0 0
        %1956 = vmatpush1.bf16.msra.mxu0 0
        %1957 = vmatprep.subr.bf16.mxu0 0
        %1958 = vmatpush1.bf16.msra.mxu0 0
        %1959 = vmatprep.subr.bf16.mxu0 0
        %1960 = vmatpush1.bf16.msra.mxu0 0
        %1961 = vmatprep.mubr.bf16.mxu0 0
        %1962 = vmatmul.mubr.bf16.gmra.mrb[0].mxu0 %v1927
        %v1963 = vpop.f32.mrb[0].mxu0
        %v1964 = vadd.f32 0.0, %v1963
        %v1965 = vpop.f32.mrb[0].mxu0
        %v1966 = vpop.f32.mrb[0].mxu0
        %v1967 = vpop.f32.mrb[0].mxu0
        %1968 = vdwg.mxu0
        %v1969 = vadd.f32 %v1637, %v1964
        %v1970 = vadd.f32 %v607, %v1969
        %v1971 = vld [vmem:[%s576] sm:$0x1]
        %v1973 = vlaneseq
        %v1974 = vshrl.u32 %v1973, 7
        %v1975 = vsub.s32 0, %v1974
        %v1976 = vrot.slane %v1971, %v1975
        %v1978 = vadd.f32 %v1970, %v1976
        %v1979 = vld [vmem:[%s579] sm:$0x1]
        %v1980 = vld [vmem:[%s582] sm:$0x1]
        %v1981 = vsel %vm610, %v1978, 0.0
        %1982 = vadd.xlane.f32.xlu0 %v1981
        %v1983 = vpop.xlane.xlu0 %1982
        %v1984 = vmul.f32 %v1983, %v614
        %v1985 = vsub.f32 %v1978, %v1984
        %v1986 = vmul.f32 %v1985, %v1985
        %v1987 = vsel %vm610, %v1986, 0.0
        %1988 = vadd.xlane.f32.xlu0 %v1987
        %v1989 = vpop.xlane.xlu0 %1988
        %v1990 = vmul.f32 %v1989, %v614
        %v1991 = vadd.f32 %v1990, 1e-05
        %v1992 = vrsqrt.pop %v1991
        %v1993 = vmul.f32 %v1985, %v1992
        %v1995 = vlaneseq
        %v1996 = vshrl.u32 %v1995, 7
        %v1997 = vsub.s32 0, %v1996
        %v1998 = vrot.slane %v1979, %v1997
        %v2000 = vmul.f32 %v1993, %v1998
        %v2002 = vlaneseq
        %v2003 = vshrl.u32 %v2002, 7
        %v2004 = vsub.s32 0, %v2003
        %v2005 = vrot.slane %v1980, %v2004
        %v2007 = vadd.f32 %v2000, %v2005
        %v2008 = vpack.c.bf16 %v2007, %v2007
        %v2009 = vld [vmem:[%s587] sm:$0xf]
        %v2010 = vld [vmem:[%s587 + $0x4] sm:$0xf]
        %v2011 = vld [vmem:[%s587 + $0x8] sm:$0xf]
        %v2012 = vld [vmem:[%s587 + $0xc] sm:$0xf]
        %v2013 = vld [vmem:[%s590] sm:$0x1]
        %v2015 = vlaneseq
        %v2016 = vshrl.u32 %v2015, 7
        %v2017 = vsub.s32 0, %v2016
        %v2018 = vrot.slane %v2013, %v2017
        %v2024 = vunpack.c.l.b16 %v2009
        %v2025 = vunpack.c.l.b16 %v2010
        %v2026 = vunpack.c.l.b16 %v2011
        %v2027 = vunpack.c.l.b16 %v2012
        %v2028 = vpack.c.b16 %v2025, %v2024
        %v2029 = vpack.c.b16 %v2027, %v2026
        %v2033 = vsel %vm610, %v2008, 0
        %2035 = vmatprep.subr.bf16.mxu0 0
        %2036 = vmatpush1.bf16.msra.mxu0 %v2028
        %2037 = vmatprep.subr.bf16.mxu0 0
        %2038 = vmatpush1.bf16.msra.mxu0 %v2029
        %2039 = vmatprep.subr.bf16.mxu0 0
        %2040 = vmatpush1.bf16.msra.mxu0 0
        %2041 = vmatprep.subr.bf16.mxu0 0
        %2042 = vmatpush1.bf16.msra.mxu0 0
        %2043 = vmatprep.subr.bf16.mxu0 0
        %2044 = vmatpush1.bf16.msra.mxu0 0
        %2045 = vmatprep.subr.bf16.mxu0 0
        %2046 = vmatpush1.bf16.msra.mxu0 0
        %2047 = vmatprep.subr.bf16.mxu0 0
        %2048 = vmatpush1.bf16.msra.mxu0 0
        %2049 = vmatprep.subr.bf16.mxu0 0
        %2050 = vmatpush1.bf16.msra.mxu0 0
        %2051 = vmatprep.subr.bf16.mxu0 0
        %2052 = vmatpush1.bf16.msra.mxu0 0
        %2053 = vmatprep.subr.bf16.mxu0 0
        %2054 = vmatpush1.bf16.msra.mxu0 0
        %2055 = vmatprep.subr.bf16.mxu0 0
        %2056 = vmatpush1.bf16.msra.mxu0 0
        %2057 = vmatprep.subr.bf16.mxu0 0
        %2058 = vmatpush1.bf16.msra.mxu0 0
        %2059 = vmatprep.subr.bf16.mxu0 0
        %2060 = vmatpush1.bf16.msra.mxu0 0
        %2061 = vmatprep.subr.bf16.mxu0 0
        %2062 = vmatpush1.bf16.msra.mxu0 0
        %2063 = vmatprep.subr.bf16.mxu0 0
        %2064 = vmatpush1.bf16.msra.mxu0 0
        %2065 = vmatprep.subr.bf16.mxu0 0
        %2066 = vmatpush1.bf16.msra.mxu0 0
        %2067 = vmatprep.mubr.bf16.mxu0 0
        %2068 = vmatmul.mubr.bf16.gmra.mrb[0].mxu0 %v2033
        %v2069 = vpop.f32.mrb[0].mxu0
        %v2070 = vadd.f32 %v2018, %v2069
        %v2071 = vpop.f32.mrb[0].mxu0
        %v2072 = vpop.f32.mrb[0].mxu0
        %v2073 = vpop.f32.mrb[0].mxu0
        %2074 = vdwg.mxu0
        %v2075 = vmul.f32 %v2070, 0.5
        %v2076 = vmul.f32 %v2070, 0.044715
        %v2077 = vmul.f32 %v2076, %v2070
        %v2078 = vmul.f32 %v2077, %v2070
        %v2079 = vadd.f32 %v2070, %v2078
        %v2080 = vmul.f32 %v2079, 0.7978846
        %v2081 = vtanh.pop %v2080
        %v2082 = vadd.f32 %v2081, 1.0
        %v2083 = vmul.f32 %v2075, %v2082
        %v2084 = vpack.c.bf16 %v2083, %v2083
        %v2085 = vld [vmem:[%s595] sm:$0xf]
        %v2086 = vld [vmem:[%s595 + $0x4] sm:$0xf]
        %v2087 = vld [vmem:[%s595 + $0x8] sm:$0xf]
        %v2088 = vld [vmem:[%s595 + $0xc] sm:$0xf]
        %v2089 = vld [vmem:[%s595 + $0x10] sm:$0xf]
        %v2090 = vld [vmem:[%s595 + $0x14] sm:$0xf]
        %v2091 = vld [vmem:[%s595 + $0x18] sm:$0xf]
        %v2092 = vld [vmem:[%s595 + $0x1c] sm:$0xf]
        %v2093 = vld [vmem:[%s598] sm:$0x1]
        %v2095 = vlaneseq
        %v2096 = vshrl.u32 %v2095, 7
        %v2097 = vsub.s32 0, %v2096
        %v2098 = vrot.slane %v2093, %v2097
        %v2108 = vunpack.c.l.b16 %v2085
        %v2109 = vunpack.c.l.b16 %v2086
        %v2110 = vunpack.c.l.b16 %v2087
        %v2111 = vunpack.c.l.b16 %v2088
        %v2112 = vunpack.c.l.b16 %v2089
        %v2113 = vunpack.c.l.b16 %v2090
        %v2114 = vunpack.c.l.b16 %v2091
        %v2115 = vunpack.c.l.b16 %v2092
        %v2116 = vpack.c.b16 %v2109, %v2108
        %v2117 = vpack.c.b16 %v2111, %v2110
        %v2118 = vpack.c.b16 %v2113, %v2112
        %v2119 = vpack.c.b16 %v2115, %v2114
        %vm2124 = vcmask 523264
        %v2126 = vsel %vm2124, %v2084, 0
        %2128 = vmatprep.subr.bf16.mxu0 0
        %2129 = vmatpush1.bf16.msra.mxu0 %v2116
        %2130 = vmatprep.subr.bf16.mxu0 0
        %2131 = vmatpush1.bf16.msra.mxu0 %v2117
        %2132 = vmatprep.subr.bf16.mxu0 0
        %2133 = vmatpush1.bf16.msra.mxu0 %v2118
        %2134 = vmatprep.subr.bf16.mxu0 0
        %2135 = vmatpush1.bf16.msra.mxu0 %v2119
        %2136 = vmatprep.subr.bf16.mxu0 0
        %2137 = vmatpush1.bf16.msra.mxu0 0
        %2138 = vmatprep.subr.bf16.mxu0 0
        %2139 = vmatpush1.bf16.msra.mxu0 0
        %2140 = vmatprep.subr.bf16.mxu0 0
        %2141 = vmatpush1.bf16.msra.mxu0 0
        %2142 = vmatprep.subr.bf16.mxu0 0
        %2143 = vmatpush1.bf16.msra.mxu0 0
        %2144 = vmatprep.subr.bf16.mxu0 0
        %2145 = vmatpush1.bf16.msra.mxu0 0
        %2146 = vmatprep.subr.bf16.mxu0 0
        %2147 = vmatpush1.bf16.msra.mxu0 0
        %2148 = vmatprep.subr.bf16.mxu0 0
        %2149 = vmatpush1.bf16.msra.mxu0 0
        %2150 = vmatprep.subr.bf16.mxu0 0
        %2151 = vmatpush1.bf16.msra.mxu0 0
        %2152 = vmatprep.subr.bf16.mxu0 0
        %2153 = vmatpush1.bf16.msra.mxu0 0
        %2154 = vmatprep.subr.bf16.mxu0 0
        %2155 = vmatpush1.bf16.msra.mxu0 0
        %2156 = vmatprep.subr.bf16.mxu0 0
        %2157 = vmatpush1.bf16.msra.mxu0 0
        %2158 = vmatprep.subr.bf16.mxu0 0
        %2159 = vmatpush1.bf16.msra.mxu0 0
        %2160 = vmatprep.mubr.bf16.mxu0 0
        %2161 = vmatmul.mubr.bf16.gmra.mrb[0].mxu0 %v2126
        %v2162 = vpop.f32.mrb[0].mxu0
        %v2163 = vadd.f32 %v2098, %v2162
        %v2164 = vpop.f32.mrb[0].mxu0
        %v2165 = vpop.f32.mrb[0].mxu0
        %v2166 = vpop.f32.mrb[0].mxu0
        %2167 = vdwg.mxu0
        %v2168 = vadd.f32 %v1978, %v2163
        %2169 = vst.msk [vmem:[#allocation2] sm:$0xff] %vm610, %v2168
        %p2170 = scmp.eq.s32.totalorder %s31, 1
        // Predicated region
        $region73: #{tpu_custom_call.1} parent=67 // pred_check
          %p2171 = pneg %p2170
        $region74: #{tpu_custom_call.1} parent=67 // pred_check_branch
          %2173 = sbr.rel (%p2171) target = $region76
        $region75: #{tpu_custom_call.1} parent=67 // pred_region
          %2174 = vst.msk [vmem:[%s553] sm:$0xff] %vm610, %v2168
        $region76: #{tpu_custom_call.1} parent=67 // pred_fallthru
          _
        %s2175 = sand.u32 %s358, 1
        %s2176 = scalar_lea.sflag [#allocation4], %s2175
        %s2177 = sand.u32 %s358, 1
        %s2178 = smul.addr %s2177, 8
        %s2179 = scalar_lea.vmem [#allocation3], %s2178
        // Predicated region
        $region77: #{tpu_custom_call.1} parent=67 // pred_check
          %p2180 = pneg %p368
        $region78: #{tpu_custom_call.1} parent=67 // pred_check_branch
          %2182 = sbr.rel (%p2180) target = $region80
        $region79: #{tpu_custom_call.1} parent=67 // pred_region
          %s2184 = ssub.s32 128, 128
          %2185 = vsyncadd %s2176, %s2184
          %s2186 = smul.addr %s30, 128
          %s2187 = scalar_lea.hbm %s12, %s2186
          %s2189 = sshll.u32 %s2179, 4
          %s2190 = int_to_ptr.vmem [resolvable:$true] %s2189
          %2192 = dma.vmem_to_hbm [thread:$0]  %s2190, 128, %s2187, %s2176
        $region80: #{tpu_custom_call.1} parent=67 // pred_fallthru
          _
      $region68: #{tpu_custom_call.1} parent=5 // pred_fallthru
        _
      %p2193 = scmp.le.s32.totalorder 2, %s21
      // Predicated region
      $region81: #{tpu_custom_call.1} parent=5 // pred_check
        %p2194 = pneg %p2193
      $region82: #{tpu_custom_call.1} parent=5 // pred_check_branch
        %2196 = sbr.rel (%p2194) target = $region84
      $region83: #{tpu_custom_call.1} parent=5 // pred_region
        %s2197 = ssub.s32 %s21, 2
        // Predicated region
        $region85: #{tpu_custom_call.1} parent=83 // pred_check
          %p2198 = pneg %p374
        $region86: #{tpu_custom_call.1} parent=83 // pred_check_branch
          %2200 = sbr.rel (%p2198) target = $region88
        $region87: #{tpu_custom_call.1} parent=83 // pred_region
          %s2201 = sand.u32 %s359, 1
          %s2202 = scalar_lea.sflag [#allocation4], %s2201
          %s2203 = sand.u32 %s359, 1
          %s2204 = smul.addr %s2203, 8
          %s2205 = scalar_lea.vmem [#allocation3], %s2204
          %2206 = dma.done %s2202, 128
        $region88: #{tpu_custom_call.1} parent=83 // pred_fallthru
          _
      $region84: #{tpu_custom_call.1} parent=5 // pred_fallthru
        _
    $region6: #{tpu_custom_call.1} parent=1 // loop_footer
      %s25 = sadd.s32 1, %s21
    $region7: #{tpu_custom_call.1} parent=1 // loop_footer_branch
      %20 = sbr.rel target = $region3
    $region8: #{tpu_custom_call.1} parent=1 // loop_exit
      _
    %2207 = vsyncpa [#allocation4], 1
    %s2208 = scalar_lea.sflag [#allocation4], 1
    %2209 = vsyncpa %s2208, 1

</llo_original>
